<compile_context>
chip_gen: v6e
topology: v6e:2x2x1
jax: 0.10.0
libtpu: 0.0.40
codegen_flags: <defaults>
</compile_context>

<pallas_src>
import functools
import math

import jax
import jax.numpy as jnp
from jax.experimental import pallas as pl
from jax.experimental.pallas import tpu as pltpu

BN_EPS = 1e-5
VMEM_LIMIT_BYTES = 48 * 1024 * 1024   # explicit scoped-VMEM limit (safe on v5e/v6e/v7x)
VMEM_TILE_BUDGET = 40 * 1024 * 1024   # budget used when choosing TK / TN


def _round_up(x, m):
    return ((x + m - 1) // m) * m


# ----------------------------------------------------------------------------
# Pallas kernels
# ----------------------------------------------------------------------------
def _conv_bn_kernel(*refs, apply_relu, has_residual, eps):
    """Fused (im2col) matmul + training-mode BatchNorm + residual + ReLU.

    grid = (Cout_tiles, K_tiles)   (K = reduction axis, last).
    The full M = N*OH*OW dimension lives in one block so BatchNorm statistics
    (mean/var over batch*spatial) can be computed in the finalize step.
    The f32 output block is the accumulator (its block index does not depend on k).
    """
    if has_residual:
        a_ref, w_ref, gb_ref, r_ref, o_ref = refs
    else:
        a_ref, w_ref, gb_ref, o_ref = refs
        r_ref = None

    k = pl.program_id(1)

    @pl.when(k == 0)
    def _init():
        o_ref[...] = jnp.zeros_like(o_ref)

    # bf16 x bf16 -> f32 accumulate on the MXU, accumulated into the resident f32 block.
    o_ref[...] += jnp.dot(a_ref[...], w_ref[...], preferred_element_type=jnp.float32)

    @pl.when(k == pl.num_programs(1) - 1)
    def _finalize():
        acc = o_ref[...]
        # training-mode BatchNorm: biased variance over the M (= N*OH*OW) axis
        mean = jnp.mean(acc, axis=0, keepdims=True)
        var = jnp.maximum(jnp.mean(acc * acc, axis=0, keepdims=True) - mean * mean, 0.0)
        y = (acc - mean) * jax.lax.rsqrt(var + eps)
        y = y * gb_ref[0:1, :] + gb_ref[1:2, :]
        if has_residual:
            y = y + r_ref[...]
        if apply_relu:
            y = jnp.maximum(y, 0.0)
        o_ref[...] = y


def _maxpool_kernel(x_ref, o_ref):
    # x_ref: (K*K, M, Cp) shifted views; reduce max over the tap axis.
    o_ref[...] = jnp.max(x_ref[...], axis=0)


# ----------------------------------------------------------------------------
# Tile selection
# ----------------------------------------------------------------------------
def _choose_tiles(M, Kp, Np, has_residual, budget=VMEM_TILE_BUDGET):
    """Largest 128-multiple divisors of (Kp, Np) whose blocks fit the VMEM budget."""
    def divisors_desc(total):
        return [d for d in range(total, 0, -128) if total % d == 0]

    for tn in divisors_desc(Np):
        for tk in divisors_desc(Kp):
            vmem = 2 * (M * tk * 2 + tk * tn * 2)   # bf16 A / W, double-buffered
            vmem += M * tn * 4                      # resident f32 output block
            vmem += 2 * 2 * tn * 4                  # (2, tn) gamma/beta, double-buffered
            if has_residual:
                vmem += 2 * M * tn * 4              # f32 residual, double-buffered
            if vmem <= budget:
                return tk, tn
    return 128, 128


# ----------------------------------------------------------------------------
# Conv (+BN +residual +ReLU) wrapper
# ----------------------------------------------------------------------------
def conv2d_bn(x, w, gamma, beta, *, stride=1, padding=0, dilation=1,
              relu=True, residual=None, eps=BN_EPS):
    """x: NHWC float32.  w: (Cout, Cin, Kh, Kw) (PyTorch layout).  Returns NHWC f32."""
    N, H, W_, Cin = x.shape
    Cout, Cin_w, Kh, Kw = w.shape
    assert Cin == Cin_w

    OH = (H + 2 * padding - dilation * (Kh - 1) - 1) // stride + 1
    OW = (W_ + 2 * padding - dilation * (Kw - 1) - 1) // stride + 1
    M = N * OH * OW
    Kc = Kh * Kw * Cin

    # ---- im2col (glue, plain JAX) ----
    xp = jnp.pad(x, ((0, 0), (padding, padding), (padding, padding), (0, 0)))
    cols = []
    for kh in range(Kh):
        for kw in range(Kw):
            h0, w0 = kh * dilation, kw * dilation
            cols.append(xp[:, h0:h0 + stride * (OH - 1) + 1:stride,
                              w0:w0 + stride * (OW - 1) + 1:stride, :])
    patches = jnp.stack(cols, axis=3)                       # (N, OH, OW, Kh*Kw, Cin)
    A = patches.reshape(M, Kc)
    Wm = jnp.transpose(w, (2, 3, 1, 0)).reshape(Kc, Cout)   # (kh,kw,ci) x co

    # ---- pad to 128-multiples only (zero padding is exact for the matmul) ----
    Kp = _round_up(Kc, 128)
    Np = _round_up(Cout, 128)
    has_residual = residual is not None
    TK, TN = _choose_tiles(M, Kp, Np, has_residual)

    # bf16 operands for the MXU (accumulation stays f32 in-kernel).
    A = jnp.pad(A, ((0, 0), (0, Kp - Kc))).astype(jnp.bfloat16)
    Wm = jnp.pad(Wm, ((0, Kp - Kc), (0, Np - Cout))).astype(jnp.bfloat16)
    gb = jnp.stack([
        jnp.pad(gamma, (0, Np - Cout), constant_values=1.0),
        jnp.pad(beta, (0, Np - Cout)),
    ]).astype(jnp.float32)                                  # (2, Np)

    inputs = [A, Wm, gb]
    in_specs = [
        pl.BlockSpec((M, TK), lambda j, k: (0, k)),
        pl.BlockSpec((TK, TN), lambda j, k: (k, j)),
        pl.BlockSpec((2, TN), lambda j, k: (0, j)),
    ]
    if has_residual:
        R = jnp.pad(residual.reshape(M, Cout), ((0, 0), (0, Np - Cout))).astype(jnp.float32)
        inputs.append(R)
        in_specs.append(pl.BlockSpec((M, TN), lambda j, k: (0, j)))

    kernel = functools.partial(_conv_bn_kernel, apply_relu=relu,
                               has_residual=has_residual, eps=eps)

    out = pl.pallas_call(
        kernel,
        out_shape=jax.ShapeDtypeStruct((M, Np), jnp.float32),
        grid_spec=pltpu.PrefetchScalarGridSpec(
            num_scalar_prefetch=0,
            grid=(Np // TN, Kp // TK),
            in_specs=in_specs,
            out_specs=pl.BlockSpec((M, TN), lambda j, k: (0, j)),
        ),
        compiler_params=pltpu.CompilerParams(
            dimension_semantics=("parallel", "arbitrary"),
            vmem_limit_bytes=VMEM_LIMIT_BYTES),
    )(*inputs)

    return out[:, :Cout].reshape(N, OH, OW, Cout)


def maxpool2d(x, *, kernel=3, stride=2, padding=1):
    """x: NHWC.  MaxPool2d(kernel, stride, padding) with -inf padding."""
    N, H, W_, C = x.shape
    OH = (H + 2 * padding - kernel) // stride + 1
    OW = (W_ + 2 * padding - kernel) // stride + 1
    M = N * OH * OW
    KK = kernel * kernel
    Cp = _round_up(C, 128)   # lane-dense output

    xp = jnp.pad(x, ((0, 0), (padding, padding), (padding, padding), (0, 0)),
                 constant_values=float("-inf"))
    cols = []
    for kh in range(kernel):
        for kw in range(kernel):
            cols.append(xp[:, kh:kh + stride * (OH - 1) + 1:stride,
                              kw:kw + stride * (OW - 1) + 1:stride, :])
    stacked = jnp.stack(cols, axis=0).reshape(KK, M, C)
    stacked = jnp.pad(stacked, ((0, 0), (0, 0), (0, Cp - C)))

    out = pl.pallas_call(
        _maxpool_kernel,
        out_shape=jax.ShapeDtypeStruct((M, Cp), x.dtype),
        grid=(1,),
        in_specs=[pl.BlockSpec((KK, M, Cp), lambda i: (0, 0, 0))],
        out_specs=pl.BlockSpec((M, Cp), lambda i: (0, 0)),
        compiler_params=pltpu.CompilerParams(
            vmem_limit_bytes=VMEM_LIMIT_BYTES),
    )(stacked)
    return out[:, :C].reshape(N, OH, OW, C)


# ----------------------------------------------------------------------------
# Parameter construction (deterministic, mirrors the PyTorch __init__)
# ----------------------------------------------------------------------------
def kaiming_conv(key, cout, cin, kh, kw):
    # nn.init.kaiming_normal_(mode='fan_out', nonlinearity='relu')
    fan_out = cout * kh * kw
    std = math.sqrt(2.0 / fan_out)
    return std * jax.random.normal(key, (cout, cin, kh, kw), dtype=jnp.float32)


def make_bottleneck_params(key, inplanes, planes, *, has_downsample):
    width = planes            # groups=1, base_width=64
    out_ch = planes * 4       # Bottleneck.expansion = 4
    k1, k2, k3, k4 = jax.random.split(key, 4)
    p = {
        "conv1_w": kaiming_conv(k1, width, inplanes, 1, 1),
        "bn1_g": jnp.ones(width, jnp.float32), "bn1_b": jnp.zeros(width, jnp.float32),
        "conv2_w": kaiming_conv(k2, width, width, 3, 3),
        "bn2_g": jnp.ones(width, jnp.float32), "bn2_b": jnp.zeros(width, jnp.float32),
        "conv3_w": kaiming_conv(k3, out_ch, width, 1, 1),
        "bn3_g": jnp.ones(out_ch, jnp.float32), "bn3_b": jnp.zeros(out_ch, jnp.float32),
    }
    if has_downsample:
        p["ds_w"] = kaiming_conv(k4, out_ch, inplanes, 1, 1)
        p["ds_g"] = jnp.ones(out_ch, jnp.float32)
        p["ds_b"] = jnp.zeros(out_ch, jnp.float32)
    return p


def build_resnet_params(key, layers=(1, 1, 1, 1)):
    """Mirrors ResNet(Bottleneck, layers, replace_stride_with_dilation=[False, 2, 2])."""
    keys = iter(jax.random.split(key, 64))
    params = {
        "conv1_w": kaiming_conv(next(keys), 64, 3, 7, 7),
        "bn1_g": jnp.ones(64, jnp.float32),
        "bn1_b": jnp.zeros(64, jnp.float32),
    }
    inplanes, dilation = 64, 1
    replace = [False, 2, 2]
    stages = []
    for stage, (planes, n_blocks) in enumerate(zip((64, 128, 256, 512), layers)):
        stride = 1 if stage == 0 else 2
        dilate = False if stage == 0 else replace[stage - 1]
        last_relu = stage != 3
        previous_dilation = dilation
        if dilate:
            dilation *= stride
            stride = 1
        blocks = []
        for b in range(n_blocks):
            if b == 0:
                has_ds = stride != 1 or inplanes != planes * 4
                blocks.append({"params": make_bottleneck_params(next(keys), inplanes, planes,
                                                                has_downsample=has_ds),
                               "stride": stride, "dilation": previous_dilation, "nl": True})
                inplanes = planes * 4
            else:
                nl = not ((not last_relu) and b == n_blocks - 1)
                blocks.append({"params": make_bottleneck_params(next(keys), inplanes, planes,
                                                                has_downsample=False),
                               "stride": 1, "dilation": dilation, "nl": nl})
        stages.append(blocks)
    params["stages"] = stages
    return params


# ----------------------------------------------------------------------------
# Forward pass
# ----------------------------------------------------------------------------
def bottleneck_forward(x, p, *, stride, dilation, nl):
    identity = x
    out = conv2d_bn(x, p["conv1_w"], p["bn1_g"], p["bn1_b"],
                    stride=1, padding=0, dilation=1, relu=True)
    out = conv2d_bn(out, p["conv2_w"], p["bn2_g"], p["bn2_b"],
                    stride=stride, padding=dilation, dilation=dilation, relu=True)
    if "ds_w" in p:
        identity = conv2d_bn(x, p["ds_w"], p["ds_g"], p["ds_b"],
                             stride=stride, padding=0, dilation=1, relu=False)
    out = conv2d_bn(out, p["conv3_w"], p["bn3_g"], p["bn3_b"],
                    stride=1, padding=0, dilation=1, relu=nl, residual=identity)
    return out


def resnet_forward(params, x_nchw):
    # layout: NCHW in -> NHWC internal (channels on the 128-lane axis) -> NCHW out
    x = jnp.transpose(x_nchw.astype(jnp.float32), (0, 2, 3, 1))
    x = conv2d_bn(x, params["conv1_w"], params["bn1_g"], params["bn1_b"],
                  stride=2, padding=3, dilation=1, relu=True)
    x = maxpool2d(x, kernel=3, stride=2, padding=1)
    for blocks in params["stages"]:
        for blk in blocks:
            x = bottleneck_forward(x, blk["params"], stride=blk["stride"],
                                   dilation=blk["dilation"], nl=blk["nl"])
    return jnp.transpose(x, (0, 3, 1, 2))


if __name__ == "__main__":
    key = jax.random.PRNGKey(0)
    pkey, xkey = jax.random.split(key)

    params = build_resnet_params(pkey, layers=(1, 1, 1, 1))
    x = jax.random.normal(xkey, (2, 3, 32, 32), dtype=jnp.float32)

    out = resnet_forward(params, x)
    out = jax.block_until_ready(out)

    assert out.shape == (2, 2048, 4, 4), out.shape
    assert bool(jnp.all(jnp.isfinite(out)))
    print("KERNEL_OK")
</pallas_src>

<mosaic_0001>
module attributes {stable_mosaic.version = 11 : i64} {
  func.func @_conv_bn_kernel(%arg0: i32, %arg1: i32, %arg2: memref<512x256xbf16, #tpu.memory_space<vmem>>, %arg3: memref<256x128xbf16, #tpu.memory_space<vmem>>, %arg4: memref<2x128xf32, #tpu.memory_space<vmem>>, %arg5: memref<512x128xf32, #tpu.memory_space<vmem>>) attributes {dimension_semantics = [#tpu.dimension_semantics<parallel>, #tpu.dimension_semantics<arbitrary>], iteration_bounds = array<i64: 1, 1>, scalar_prefetch = 0 : i64, scratch_operands = 0 : i64, tpu.core_type = #tpu.core_type<tc>, window_params = [{transform_indices = @transform_0, window_bounds = array<i64: 512, 256>}, {transform_indices = @transform_1, window_bounds = array<i64: 256, 128>}, {transform_indices = @transform_2, window_bounds = array<i64: 2, 128>}, {transform_indices = @transform_3, window_bounds = array<i64: 512, 128>}]} {
    %c0_i32 = arith.constant 0 : i32
    %0 = arith.cmpi eq, %arg1, %c0_i32 : i32
    %1 = arith.extui %0 : i1 to i32
    %c0_i32_0 = arith.constant 0 : i32
    %2 = arith.cmpi ne, %1, %c0_i32_0 : i32
    scf.if %2 {
      %cst_10 = arith.constant 0.000000e+00 : f32
      %12 = vector.broadcast %cst_10 : f32 to vector<512x128xf32>
      %c0_11 = arith.constant 0 : index
      %c0_12 = arith.constant 0 : index
      %13 = vector.load %arg5[%c0_11, %c0_12] : memref<512x128xf32, #tpu.memory_space<vmem>>, vector<512x128xf32>
      tpu.vector_store %arg5[%c0_11, %c0_12], %12 {strides = array<i32>} : memref<512x128xf32, #tpu.memory_space<vmem>>, vector<512x128xf32>,
    } else {
    }
    %c0 = arith.constant 0 : index
    %c0_1 = arith.constant 0 : index
    %3 = vector.load %arg5[%c0, %c0_1] : memref<512x128xf32, #tpu.memory_space<vmem>>, vector<512x128xf32>
    %c0_2 = arith.constant 0 : index
    %c0_3 = arith.constant 0 : index
    %4 = vector.load %arg2[%c0_2, %c0_3] : memref<512x256xbf16, #tpu.memory_space<vmem>>, vector<512x256xbf16>
    %c0_4 = arith.constant 0 : index
    %c0_5 = arith.constant 0 : index
    %5 = vector.load %arg3[%c0_4, %c0_5] : memref<256x128xbf16, #tpu.memory_space<vmem>>, vector<256x128xbf16>
    %cst = arith.constant dense<0.000000e+00> : vector<512x128xf32>
    %6 = tpu.matmul %4, %5, %cst {dimension_numbers = #tpu.dot_dimension_numbers<[1], [0], [0], [1], [0, 0, 1, 1], [], []>} : vector<512x256xbf16>, vector<256x128xbf16>, vector<512x128xf32> -> vector<512x128xf32>
    %7 = arith.addf %3, %6 : vector<512x128xf32>
    %c0_6 = arith.constant 0 : index
    %c0_7 = arith.constant 0 : index
    %8 = vector.load %arg5[%c0_6, %c0_7] : memref<512x128xf32, #tpu.memory_space<vmem>>, vector<512x128xf32>
    tpu.vector_store %arg5[%c0_6, %c0_7], %7 {strides = array<i32>} : memref<512x128xf32, #tpu.memory_space<vmem>>, vector<512x128xf32>,
    %c0_i32_8 = arith.constant 0 : i32
    %9 = arith.cmpi eq, %arg1, %c0_i32_8 : i32
    %10 = arith.extui %9 : i1 to i32
    %c0_i32_9 = arith.constant 0 : i32
    %11 = arith.cmpi ne, %10, %c0_i32_9 : i32
    scf.if %11 {
      %c0_10 = arith.constant 0 : index
      %c0_11 = arith.constant 0 : index
      %12 = vector.load %arg5[%c0_10, %c0_11] : memref<512x128xf32, #tpu.memory_space<vmem>>, vector<512x128xf32>
      %cst_12 = arith.constant dense<0.000000e+00> : vector<128xf32>
      %13 = vector.multi_reduction <add>, %12, %cst_12 [0] : vector<512x128xf32> to vector<128xf32>
      %14 = vector.shape_cast %13 : vector<128xf32> to vector<1x128xf32>
      %cst_13 = arith.constant 5.120000e+02 : f32
      %15 = vector.broadcast %cst_13 : f32 to vector<1x128xf32>
      %16 = arith.divf %14, %15 : vector<1x128xf32>
      %17 = arith.mulf %12, %12 : vector<512x128xf32>
      %cst_14 = arith.constant dense<0.000000e+00> : vector<128xf32>
      %18 = vector.multi_reduction <add>, %17, %cst_14 [0] : vector<512x128xf32> to vector<128xf32>
      %19 = vector.shape_cast %18 : vector<128xf32> to vector<1x128xf32>
      %cst_15 = arith.constant 5.120000e+02 : f32
      %20 = vector.broadcast %cst_15 : f32 to vector<1x128xf32>
      %21 = arith.divf %19, %20 : vector<1x128xf32>
      %22 = arith.mulf %16, %16 : vector<1x128xf32>
      %23 = arith.subf %21, %22 : vector<1x128xf32>
      %cst_16 = arith.constant 0.000000e+00 : f32
      %24 = vector.broadcast %cst_16 : f32 to vector<1x128xf32>
      %25 = arith.maximumf %23, %24 : vector<1x128xf32>
      %26 = vector.broadcast %16 : vector<1x128xf32> to vector<512x128xf32>
      %27 = arith.subf %12, %26 : vector<512x128xf32>
      %cst_17 = arith.constant 9.99999974E-6 : f32
      %28 = vector.broadcast %cst_17 : f32 to vector<1x128xf32>
      %29 = arith.addf %25, %28 : vector<1x128xf32>
      %30 = math.rsqrt %29 : vector<1x128xf32>
      %31 = vector.broadcast %30 : vector<1x128xf32> to vector<512x128xf32>
      %32 = arith.mulf %27, %31 : vector<512x128xf32>
      %c0_18 = arith.constant 0 : index
      %c0_19 = arith.constant 0 : index
      %33 = vector.load %arg4[%c0_18, %c0_19] : memref<2x128xf32, #tpu.memory_space<vmem>>, vector<1x128xf32>
      %34 = vector.broadcast %33 : vector<1x128xf32> to vector<512x128xf32>
      %35 = arith.mulf %32, %34 : vector<512x128xf32>
      %c1 = arith.constant 1 : index
      %c0_20 = arith.constant 0 : index
      %36 = vector.load %arg4[%c1, %c0_20] : memref<2x128xf32, #tpu.memory_space<vmem>>, vector<1x128xf32>
      %37 = vector.broadcast %36 : vector<1x128xf32> to vector<512x128xf32>
      %38 = arith.addf %35, %37 : vector<512x128xf32>
      %cst_21 = arith.constant 0.000000e+00 : f32
      %39 = vector.broadcast %cst_21 : f32 to vector<512x128xf32>
      %40 = arith.maximumf %38, %39 : vector<512x128xf32>
      %c0_22 = arith.constant 0 : index
      %c0_23 = arith.constant 0 : index
      %41 = vector.load %arg5[%c0_22, %c0_23] : memref<512x128xf32, #tpu.memory_space<vmem>>, vector<512x128xf32>
      tpu.vector_store %arg5[%c0_22, %c0_23], %40 {strides = array<i32>} : memref<512x128xf32, #tpu.memory_space<vmem>>, vector<512x128xf32>,
    } else {
    }
    return
  }
  func.func @transform_0(%arg0: i32, %arg1: i32) -> (i32, i32) {
    %c0_i32 = arith.constant 0 : i32
    %c0_i32_0 = arith.constant 0 : i32
    return %c0_i32, %arg1 : i32, i32
  }
  func.func @transform_1(%arg0: i32, %arg1: i32) -> (i32, i32) {
    %c0_i32 = arith.constant 0 : i32
    return %arg1, %arg0 : i32, i32
  }
  func.func @transform_2(%arg0: i32, %arg1: i32) -> (i32, i32) {
    %c0_i32 = arith.constant 0 : i32
    %c0_i32_0 = arith.constant 0 : i32
    return %c0_i32, %arg0 : i32, i32
  }
  func.func @transform_3(%arg0: i32, %arg1: i32) -> (i32, i32) {
    %c0_i32 = arith.constant 0 : i32
    %c0_i32_0 = arith.constant 0 : i32
    return %c0_i32, %arg0 : i32, i32
  }
}

</mosaic_0001>

<llo_original>
// kernel: tpu_custom_call.1
$region0: #{tpu_custom_call.1}
  #allocation0 [shape = 'u32[]', space=smem, size = 0x4, offset = 0x4, fixed_abs, tag = 'smem constant byte address 0x4 - core index']
  #allocation1 [shape = 'u32[144,128]{1,0:T(1,128)}', space=vmem, size = 0x12000, scoped, tag = 'internal scratch']
  %s0 = inlined_call_operand.hbm [shape: bf16[512,256], index: 0, kind: input, shape index: {}]
  %s1 = inlined_call_operand.hbm [shape: bf16[256,128], index: 1, kind: input, shape index: {}]
  %s2 = inlined_call_operand.vmem [shape: f32[2,128], index: 2, kind: input, shape index: {}]
  %s3 = inlined_call_operand.hbm [shape: f32[512,128], index: 3, kind: output, shape index: {}]
  %s4 = sld [smem:[#allocation0]]
  $region38: #{tpu_custom_call.1} parent=0
    _
  %s6 = ssub.s32 1, %s4
  %s7 = scalar_select 0, %s6, %s4
  $region1: #{tpu_custom_call.1} parent=0
    #allocation2 [shape = 'u8[262144]{0}', space=vmem, size = 0x40000, scoped, tag = 'input window, operand 0, single buffered']
    #allocation3 [shape = 's32[1]{0}', space=sflag, size = 0x4, scoped, tag = 'scoped memory for tpu_custom_call.1']
    #allocation4 [shape = 's32[1]{0}', space=sflag, size = 0x4, scoped, tag = 'scoped memory for tpu_custom_call.1']
    #allocation5 [shape = 'u8[65536]{0}', space=vmem, size = 0x10000, scoped, tag = 'input window, operand 1, single buffered']
    #allocation6 [shape = 's32[1]{0}', space=sflag, size = 0x4, scoped, tag = 'scoped memory for tpu_custom_call.1']
    #allocation7 [shape = 'u8[262144]{0}', space=vmem, size = 0x40000, scoped, tag = 'output window, operand 0, single buffered']
    %8 = vsyncpa [#allocation3], 0
    %9 = vsyncpa [#allocation6], 0
    %10 = vsyncpa [#allocation4], 0
    // Predicated region
    $region2: #{tpu_custom_call.1} parent=1 // pred_check
      _
    $region3: #{tpu_custom_call.1} parent=1 // pred_check_branch
      %12 = sbr.rel (0) target = $region5
    $region4: #{tpu_custom_call.1} parent=1 // pred_region
      %s14 = ssub.s32 8192, 8192
      %15 = vsyncadd [#allocation3], %s14
      %s16 = sshll.u32 [#allocation2], 4
      %s17 = int_to_ptr.vmem [resolvable:$true] %s16
      %22 = dma.hbm_to_vmem [thread:$0]  %s0, 8192, %s17, [#allocation3], 128, 128, 8
    $region5: #{tpu_custom_call.1} parent=1 // pred_fallthru
      _
    // Predicated region
    $region6: #{tpu_custom_call.1} parent=1 // pred_check
      _
    $region7: #{tpu_custom_call.1} parent=1 // pred_check_branch
      %24 = sbr.rel (0) target = $region9
    $region8: #{tpu_custom_call.1} parent=1 // pred_region
      %s26 = ssub.s32 2048, 2048
      %27 = vsyncadd [#allocation6], %s26
      %s28 = sshll.u32 [#allocation5], 4
      %s29 = int_to_ptr.vmem [resolvable:$true] %s28
      %34 = dma.hbm_to_vmem [thread:$0]  %s1, 2048, %s29, [#allocation6], 64, 64, 4
    $region9: #{tpu_custom_call.1} parent=1 // pred_fallthru
      _
    // Predicated region
    $region10: #{tpu_custom_call.1} parent=1 // pred_check
      _
    $region11: #{tpu_custom_call.1} parent=1 // pred_check_branch
      %36 = sbr.rel (0) target = $region13
    $region12: #{tpu_custom_call.1} parent=1 // pred_region
      _
    $region13: #{tpu_custom_call.1} parent=1 // pred_fallthru
      _
    // Predicated region
    $region14: #{tpu_custom_call.1} parent=1 // pred_check
      _
    $region15: #{tpu_custom_call.1} parent=1 // pred_check_branch
      %38 = sbr.rel (0) target = $region17
    $region16: #{tpu_custom_call.1} parent=1 // pred_region
      %39 = dma.done [#allocation3], 8192
    $region17: #{tpu_custom_call.1} parent=1 // pred_fallthru
      _
    // Predicated region
    $region18: #{tpu_custom_call.1} parent=1 // pred_check
      _
    $region19: #{tpu_custom_call.1} parent=1 // pred_check_branch
      %41 = sbr.rel (0) target = $region21
    $region20: #{tpu_custom_call.1} parent=1 // pred_region
      %42 = dma.done [#allocation6], 2048
    $region21: #{tpu_custom_call.1} parent=1 // pred_fallthru
      _
    %p44 = scmp.eq.s32.totalorder 0, 0
    // Predicated region
    $region22: #{tpu_custom_call.1} parent=1 // pred_check
      %p45 = pneg %p44
    $region23: #{tpu_custom_call.1} parent=1 // pred_check_branch
      %47 = sbr.rel (%p45) target = $region25
    $region24: #{tpu_custom_call.1} parent=1 // pred_region
      %48 = vst [vmem:[#allocation7] sm:$0xff] 0.0
      %49 = vst [vmem:[#allocation7 + $0x8] sm:$0xff] 0.0
      %50 = vst [vmem:[#allocation7 + $0x10] sm:$0xff] 0.0
      %51 = vst [vmem:[#allocation7 + $0x18] sm:$0xff] 0.0
      %52 = vst [vmem:[#allocation7 + $0x20] sm:$0xff] 0.0
      %53 = vst [vmem:[#allocation7 + $0x28] sm:$0xff] 0.0
      %54 = vst [vmem:[#allocation7 + $0x30] sm:$0xff] 0.0
      %55 = vst [vmem:[#allocation7 + $0x38] sm:$0xff] 0.0
      %56 = vst [vmem:[#allocation7 + $0x40] sm:$0xff] 0.0
      %57 = vst [vmem:[#allocation7 + $0x48] sm:$0xff] 0.0
      %58 = vst [vmem:[#allocation7 + $0x50] sm:$0xff] 0.0
      %59 = vst [vmem:[#allocation7 + $0x58] sm:$0xff] 0.0
      %60 = vst [vmem:[#allocation7 + $0x60] sm:$0xff] 0.0
      %61 = vst [vmem:[#allocation7 + $0x68] sm:$0xff] 0.0
      %62 = vst [vmem:[#allocation7 + $0x70] sm:$0xff] 0.0
      %63 = vst [vmem:[#allocation7 + $0x78] sm:$0xff] 0.0
      %64 = vst [vmem:[#allocation7 + $0x80] sm:$0xff] 0.0
      %65 = vst [vmem:[#allocation7 + $0x88] sm:$0xff] 0.0
      %66 = vst [vmem:[#allocation7 + $0x90] sm:$0xff] 0.0
      %67 = vst [vmem:[#allocation7 + $0x98] sm:$0xff] 0.0
      %68 = vst [vmem:[#allocation7 + $0xa0] sm:$0xff] 0.0
      %69 = vst [vmem:[#allocation7 + $0xa8] sm:$0xff] 0.0
      %70 = vst [vmem:[#allocation7 + $0xb0] sm:$0xff] 0.0
      %71 = vst [vmem:[#allocation7 + $0xb8] sm:$0xff] 0.0
      %72 = vst [vmem:[#allocation7 + $0xc0] sm:$0xff] 0.0
      %73 = vst [vmem:[#allocation7 + $0xc8] sm:$0xff] 0.0
      %74 = vst [vmem:[#allocation7 + $0xd0] sm:$0xff] 0.0
      %75 = vst [vmem:[#allocation7 + $0xd8] sm:$0xff] 0.0
      %76 = vst [vmem:[#allocation7 + $0xe0] sm:$0xff] 0.0
      %77 = vst [vmem:[#allocation7 + $0xe8] sm:$0xff] 0.0
      %78 = vst [vmem:[#allocation7 + $0xf0] sm:$0xff] 0.0
      %79 = vst [vmem:[#allocation7 + $0xf8] sm:$0xff] 0.0
      %80 = vst [vmem:[#allocation7 + $0x100] sm:$0xff] 0.0
      %81 = vst [vmem:[#allocation7 + $0x108] sm:$0xff] 0.0
      %82 = vst [vmem:[#allocation7 + $0x110] sm:$0xff] 0.0
      %83 = vst [vmem:[#allocation7 + $0x118] sm:$0xff] 0.0
      %84 = vst [vmem:[#allocation7 + $0x120] sm:$0xff] 0.0
      %85 = vst [vmem:[#allocation7 + $0x128] sm:$0xff] 0.0
      %86 = vst [vmem:[#allocation7 + $0x130] sm:$0xff] 0.0
      %87 = vst [vmem:[#allocation7 + $0x138] sm:$0xff] 0.0
      %88 = vst [vmem:[#allocation7 + $0x140] sm:$0xff] 0.0
      %89 = vst [vmem:[#allocation7 + $0x148] sm:$0xff] 0.0
      %90 = vst [vmem:[#allocation7 + $0x150] sm:$0xff] 0.0
      %91 = vst [vmem:[#allocation7 + $0x158] sm:$0xff] 0.0
      %92 = vst [vmem:[#allocation7 + $0x160] sm:$0xff] 0.0
      %93 = vst [vmem:[#allocation7 + $0x168] sm:$0xff] 0.0
      %94 = vst [vmem:[#allocation7 + $0x170] sm:$0xff] 0.0
      %95 = vst [vmem:[#allocation7 + $0x178] sm:$0xff] 0.0
      %96 = vst [vmem:[#allocation7 + $0x180] sm:$0xff] 0.0
      %97 = vst [vmem:[#allocation7 + $0x188] sm:$0xff] 0.0
      %98 = vst [vmem:[#allocation7 + $0x190] sm:$0xff] 0.0
      %99 = vst [vmem:[#allocation7 + $0x198] sm:$0xff] 0.0
      %100 = vst [vmem:[#allocation7 + $0x1a0] sm:$0xff] 0.0
      %101 = vst [vmem:[#allocation7 + $0x1a8] sm:$0xff] 0.0
      %102 = vst [vmem:[#allocation7 + $0x1b0] sm:$0xff] 0.0
      %103 = vst [vmem:[#allocation7 + $0x1b8] sm:$0xff] 0.0
      %104 = vst [vmem:[#allocation7 + $0x1c0] sm:$0xff] 0.0
      %105 = vst [vmem:[#allocation7 + $0x1c8] sm:$0xff] 0.0
      %106 = vst [vmem:[#allocation7 + $0x1d0] sm:$0xff] 0.0
      %107 = vst [vmem:[#allocation7 + $0x1d8] sm:$0xff] 0.0
      %108 = vst [vmem:[#allocation7 + $0x1e0] sm:$0xff] 0.0
      %109 = vst [vmem:[#allocation7 + $0x1e8] sm:$0xff] 0.0
      %110 = vst [vmem:[#allocation7 + $0x1f0] sm:$0xff] 0.0
      %111 = vst [vmem:[#allocation7 + $0x1f8] sm:$0xff] 0.0
    $region25: #{tpu_custom_call.1} parent=1 // pred_fallthru
      _
    %v112 = vld [vmem:[#allocation7] sm:$0xff]
    %v113 = vld [vmem:[#allocation7 + $0x8] sm:$0xff]
    %v114 = vld [vmem:[#allocation7 + $0x10] sm:$0xff]
    %v115 = vld [vmem:[#allocation7 + $0x18] sm:$0xff]
    %v116 = vld [vmem:[#allocation7 + $0x20] sm:$0xff]
    %v117 = vld [vmem:[#allocation7 + $0x28] sm:$0xff]
    %v118 = vld [vmem:[#allocation7 + $0x30] sm:$0xff]
    %v119 = vld [vmem:[#allocation7 + $0x38] sm:$0xff]
    %v120 = vld [vmem:[#allocation7 + $0x40] sm:$0xff]
    %v121 = vld [vmem:[#allocation7 + $0x48] sm:$0xff]
    %v122 = vld [vmem:[#allocation7 + $0x50] sm:$0xff]
    %v123 = vld [vmem:[#allocation7 + $0x58] sm:$0xff]
    %v124 = vld [vmem:[#allocation7 + $0x60] sm:$0xff]
    %v125 = vld [vmem:[#allocation7 + $0x68] sm:$0xff]
    %v126 = vld [vmem:[#allocation7 + $0x70] sm:$0xff]
    %v127 = vld [vmem:[#allocation7 + $0x78] sm:$0xff]
    %v128 = vld [vmem:[#allocation7 + $0x80] sm:$0xff]
    %v129 = vld [vmem:[#allocation7 + $0x88] sm:$0xff]
    %v130 = vld [vmem:[#allocation7 + $0x90] sm:$0xff]
    %v131 = vld [vmem:[#allocation7 + $0x98] sm:$0xff]
    %v132 = vld [vmem:[#allocation7 + $0xa0] sm:$0xff]
    %v133 = vld [vmem:[#allocation7 + $0xa8] sm:$0xff]
    %v134 = vld [vmem:[#allocation7 + $0xb0] sm:$0xff]
    %v135 = vld [vmem:[#allocation7 + $0xb8] sm:$0xff]
    %v136 = vld [vmem:[#allocation7 + $0xc0] sm:$0xff]
    %v137 = vld [vmem:[#allocation7 + $0xc8] sm:$0xff]
    %v138 = vld [vmem:[#allocation7 + $0xd0] sm:$0xff]
    %v139 = vld [vmem:[#allocation7 + $0xd8] sm:$0xff]
    %v140 = vld [vmem:[#allocation7 + $0xe0] sm:$0xff]
    %v141 = vld [vmem:[#allocation7 + $0xe8] sm:$0xff]
    %v142 = vld [vmem:[#allocation7 + $0xf0] sm:$0xff]
    %v143 = vld [vmem:[#allocation7 + $0xf8] sm:$0xff]
    %v144 = vld [vmem:[#allocation7 + $0x100] sm:$0xff]
    %v145 = vld [vmem:[#allocation7 + $0x108] sm:$0xff]
    %v146 = vld [vmem:[#allocation7 + $0x110] sm:$0xff]
    %v147 = vld [vmem:[#allocation7 + $0x118] sm:$0xff]
    %v148 = vld [vmem:[#allocation7 + $0x120] sm:$0xff]
    %v149 = vld [vmem:[#allocation7 + $0x128] sm:$0xff]
    %v150 = vld [vmem:[#allocation7 + $0x130] sm:$0xff]
    %v151 = vld [vmem:[#allocation7 + $0x138] sm:$0xff]
    %v152 = vld [vmem:[#allocation7 + $0x140] sm:$0xff]
    %v153 = vld [vmem:[#allocation7 + $0x148] sm:$0xff]
    %v154 = vld [vmem:[#allocation7 + $0x150] sm:$0xff]
    %v155 = vld [vmem:[#allocation7 + $0x158] sm:$0xff]
    %v156 = vld [vmem:[#allocation7 + $0x160] sm:$0xff]
    %v157 = vld [vmem:[#allocation7 + $0x168] sm:$0xff]
    %v158 = vld [vmem:[#allocation7 + $0x170] sm:$0xff]
    %v159 = vld [vmem:[#allocation7 + $0x178] sm:$0xff]
    %v160 = vld [vmem:[#allocation7 + $0x180] sm:$0xff]
    %v161 = vld [vmem:[#allocation7 + $0x188] sm:$0xff]
    %v162 = vld [vmem:[#allocation7 + $0x190] sm:$0xff]
    %v163 = vld [vmem:[#allocation7 + $0x198] sm:$0xff]
    %v164 = vld [vmem:[#allocation7 + $0x1a0] sm:$0xff]
    %v165 = vld [vmem:[#allocation7 + $0x1a8] sm:$0xff]
    %v166 = vld [vmem:[#allocation7 + $0x1b0] sm:$0xff]
    %v167 = vld [vmem:[#allocation7 + $0x1b8] sm:$0xff]
    %v168 = vld [vmem:[#allocation7 + $0x1c0] sm:$0xff]
    %v169 = vld [vmem:[#allocation7 + $0x1c8] sm:$0xff]
    %v170 = vld [vmem:[#allocation7 + $0x1d0] sm:$0xff]
    %v171 = vld [vmem:[#allocation7 + $0x1d8] sm:$0xff]
    %v172 = vld [vmem:[#allocation7 + $0x1e0] sm:$0xff]
    %v173 = vld [vmem:[#allocation7 + $0x1e8] sm:$0xff]
    %v174 = vld [vmem:[#allocation7 + $0x1f0] sm:$0xff]
    %v175 = vld [vmem:[#allocation7 + $0x1f8] sm:$0xff]
    %v176 = vld [vmem:[#allocation2] sm:$0xff]
    %v177 = vld [vmem:[#allocation2 + $0x8] sm:$0xff]
    %v178 = vld [vmem:[#allocation2 + $0x10] sm:$0xff]
    %v179 = vld [vmem:[#allocation2 + $0x18] sm:$0xff]
    %v180 = vld [vmem:[#allocation2 + $0x20] sm:$0xff]
    %v181 = vld [vmem:[#allocation2 + $0x28] sm:$0xff]
    %v182 = vld [vmem:[#allocation2 + $0x30] sm:$0xff]
    %v183 = vld [vmem:[#allocation2 + $0x38] sm:$0xff]
    %v184 = vld [vmem:[#allocation2 + $0x40] sm:$0xff]
    %v185 = vld [vmem:[#allocation2 + $0x48] sm:$0xff]
    %v186 = vld [vmem:[#allocation2 + $0x50] sm:$0xff]
    %v187 = vld [vmem:[#allocation2 + $0x58] sm:$0xff]
    %v188 = vld [vmem:[#allocation2 + $0x60] sm:$0xff]
    %v189 = vld [vmem:[#allocation2 + $0x68] sm:$0xff]
    %v190 = vld [vmem:[#allocation2 + $0x70] sm:$0xff]
    %v191 = vld [vmem:[#allocation2 + $0x78] sm:$0xff]
    %v192 = vld [vmem:[#allocation2 + $0x80] sm:$0xff]
    %v193 = vld [vmem:[#allocation2 + $0x88] sm:$0xff]
    %v194 = vld [vmem:[#allocation2 + $0x90] sm:$0xff]
    %v195 = vld [vmem:[#allocation2 + $0x98] sm:$0xff]
    %v196 = vld [vmem:[#allocation2 + $0xa0] sm:$0xff]
    %v197 = vld [vmem:[#allocation2 + $0xa8] sm:$0xff]
    %v198 = vld [vmem:[#allocation2 + $0xb0] sm:$0xff]
    %v199 = vld [vmem:[#allocation2 + $0xb8] sm:$0xff]
    %v200 = vld [vmem:[#allocation2 + $0xc0] sm:$0xff]
    %v201 = vld [vmem:[#allocation2 + $0xc8] sm:$0xff]
    %v202 = vld [vmem:[#allocation2 + $0xd0] sm:$0xff]
    %v203 = vld [vmem:[#allocation2 + $0xd8] sm:$0xff]
    %v204 = vld [vmem:[#allocation2 + $0xe0] sm:$0xff]
    %v205 = vld [vmem:[#allocation2 + $0xe8] sm:$0xff]
    %v206 = vld [vmem:[#allocation2 + $0xf0] sm:$0xff]
    %v207 = vld [vmem:[#allocation2 + $0xf8] sm:$0xff]
    %v208 = vld [vmem:[#allocation2 + $0x100] sm:$0xff]
    %v209 = vld [vmem:[#allocation2 + $0x108] sm:$0xff]
    %v210 = vld [vmem:[#allocation2 + $0x110] sm:$0xff]
    %v211 = vld [vmem:[#allocation2 + $0x118] sm:$0xff]
    %v212 = vld [vmem:[#allocation2 + $0x120] sm:$0xff]
    %v213 = vld [vmem:[#allocation2 + $0x128] sm:$0xff]
    %v214 = vld [vmem:[#allocation2 + $0x130] sm:$0xff]
    %v215 = vld [vmem:[#allocation2 + $0x138] sm:$0xff]
    %v216 = vld [vmem:[#allocation2 + $0x140] sm:$0xff]
    %v217 = vld [vmem:[#allocation2 + $0x148] sm:$0xff]
    %v218 = vld [vmem:[#allocation2 + $0x150] sm:$0xff]
    %v219 = vld [vmem:[#allocation2 + $0x158] sm:$0xff]
    %v220 = vld [vmem:[#allocation2 + $0x160] sm:$0xff]
    %v221 = vld [vmem:[#allocation2 + $0x168] sm:$0xff]
    %v222 = vld [vmem:[#allocation2 + $0x170] sm:$0xff]
    %v223 = vld [vmem:[#allocation2 + $0x178] sm:$0xff]
    %v224 = vld [vmem:[#allocation2 + $0x180] sm:$0xff]
    %v225 = vld [vmem:[#allocation2 + $0x188] sm:$0xff]
    %v226 = vld [vmem:[#allocation2 + $0x190] sm:$0xff]
    %v227 = vld [vmem:[#allocation2 + $0x198] sm:$0xff]
    %v228 = vld [vmem:[#allocation2 + $0x1a0] sm:$0xff]
    %v229 = vld [vmem:[#allocation2 + $0x1a8] sm:$0xff]
    %v230 = vld [vmem:[#allocation2 + $0x1b0] sm:$0xff]
    %v231 = vld [vmem:[#allocation2 + $0x1b8] sm:$0xff]
    %v232 = vld [vmem:[#allocation2 + $0x1c0] sm:$0xff]
    %v233 = vld [vmem:[#allocation2 + $0x1c8] sm:$0xff]
    %v234 = vld [vmem:[#allocation2 + $0x1d0] sm:$0xff]
    %v235 = vld [vmem:[#allocation2 + $0x1d8] sm:$0xff]
    %v236 = vld [vmem:[#allocation2 + $0x1e0] sm:$0xff]
    %v237 = vld [vmem:[#allocation2 + $0x1e8] sm:$0xff]
    %v238 = vld [vmem:[#allocation2 + $0x1f0] sm:$0xff]
    %v239 = vld [vmem:[#allocation2 + $0x1f8] sm:$0xff]
    %v240 = vld [vmem:[#allocation5] sm:$0xf]
    %v241 = vld [vmem:[#allocation5 + $0x4] sm:$0xf]
    %v242 = vld [vmem:[#allocation5 + $0x8] sm:$0xf]
    %v243 = vld [vmem:[#allocation5 + $0xc] sm:$0xf]
    %v244 = vld [vmem:[#allocation5 + $0x10] sm:$0xf]
    %v245 = vld [vmem:[#allocation5 + $0x14] sm:$0xf]
    %v246 = vld [vmem:[#allocation5 + $0x18] sm:$0xf]
    %v247 = vld [vmem:[#allocation5 + $0x1c] sm:$0xf]
    %v248 = vld [vmem:[#allocation5 + $0x20] sm:$0xf]
    %v249 = vld [vmem:[#allocation5 + $0x24] sm:$0xf]
    %v250 = vld [vmem:[#allocation5 + $0x28] sm:$0xf]
    %v251 = vld [vmem:[#allocation5 + $0x2c] sm:$0xf]
    %v252 = vld [vmem:[#allocation5 + $0x30] sm:$0xf]
    %v253 = vld [vmem:[#allocation5 + $0x34] sm:$0xf]
    %v254 = vld [vmem:[#allocation5 + $0x38] sm:$0xf]
    %v255 = vld [vmem:[#allocation5 + $0x3c] sm:$0xf]
    %v256 = vld [vmem:[#allocation5 + $0x40] sm:$0xf]
    %v257 = vld [vmem:[#allocation5 + $0x44] sm:$0xf]
    %v258 = vld [vmem:[#allocation5 + $0x48] sm:$0xf]
    %v259 = vld [vmem:[#allocation5 + $0x4c] sm:$0xf]
    %v260 = vld [vmem:[#allocation5 + $0x50] sm:$0xf]
    %v261 = vld [vmem:[#allocation5 + $0x54] sm:$0xf]
    %v262 = vld [vmem:[#allocation5 + $0x58] sm:$0xf]
    %v263 = vld [vmem:[#allocation5 + $0x5c] sm:$0xf]
    %v264 = vld [vmem:[#allocation5 + $0x60] sm:$0xf]
    %v265 = vld [vmem:[#allocation5 + $0x64] sm:$0xf]
    %v266 = vld [vmem:[#allocation5 + $0x68] sm:$0xf]
    %v267 = vld [vmem:[#allocation5 + $0x6c] sm:$0xf]
    %v268 = vld [vmem:[#allocation5 + $0x70] sm:$0xf]
    %v269 = vld [vmem:[#allocation5 + $0x74] sm:$0xf]
    %v270 = vld [vmem:[#allocation5 + $0x78] sm:$0xf]
    %v271 = vld [vmem:[#allocation5 + $0x7c] sm:$0xf]
    %v336 = vunpack.c.l.b16 %v176
    %v337 = vunpack.c.h.b16 %v176
    %v338 = vunpack.c.l.b16 %v177
    %v339 = vunpack.c.h.b16 %v177
    %v340 = vunpack.c.l.b16 %v178
    %v341 = vunpack.c.h.b16 %v178
    %v342 = vunpack.c.l.b16 %v179
    %v343 = vunpack.c.h.b16 %v179
    %v344 = vunpack.c.l.b16 %v180
    %v345 = vunpack.c.h.b16 %v180
    %v346 = vunpack.c.l.b16 %v181
    %v347 = vunpack.c.h.b16 %v181
    %v348 = vunpack.c.l.b16 %v182
    %v349 = vunpack.c.h.b16 %v182
    %v350 = vunpack.c.l.b16 %v183
    %v351 = vunpack.c.h.b16 %v183
    %v352 = vunpack.c.l.b16 %v184
    %v353 = vunpack.c.h.b16 %v184
    %v354 = vunpack.c.l.b16 %v185
    %v355 = vunpack.c.h.b16 %v185
    %v356 = vunpack.c.l.b16 %v186
    %v357 = vunpack.c.h.b16 %v186
    %v358 = vunpack.c.l.b16 %v187
    %v359 = vunpack.c.h.b16 %v187
    %v360 = vunpack.c.l.b16 %v188
    %v361 = vunpack.c.h.b16 %v188
    %v362 = vunpack.c.l.b16 %v189
    %v363 = vunpack.c.h.b16 %v189
    %v364 = vunpack.c.l.b16 %v190
    %v365 = vunpack.c.h.b16 %v190
    %v366 = vunpack.c.l.b16 %v191
    %v367 = vunpack.c.h.b16 %v191
    %v368 = vunpack.c.l.b16 %v192
    %v369 = vunpack.c.h.b16 %v192
    %v370 = vunpack.c.l.b16 %v193
    %v371 = vunpack.c.h.b16 %v193
    %v372 = vunpack.c.l.b16 %v194
    %v373 = vunpack.c.h.b16 %v194
    %v374 = vunpack.c.l.b16 %v195
    %v375 = vunpack.c.h.b16 %v195
    %v376 = vunpack.c.l.b16 %v196
    %v377 = vunpack.c.h.b16 %v196
    %v378 = vunpack.c.l.b16 %v197
    %v379 = vunpack.c.h.b16 %v197
    %v380 = vunpack.c.l.b16 %v198
    %v381 = vunpack.c.h.b16 %v198
    %v382 = vunpack.c.l.b16 %v199
    %v383 = vunpack.c.h.b16 %v199
    %v384 = vunpack.c.l.b16 %v200
    %v385 = vunpack.c.h.b16 %v200
    %v386 = vunpack.c.l.b16 %v201
    %v387 = vunpack.c.h.b16 %v201
    %v388 = vunpack.c.l.b16 %v202
    %v389 = vunpack.c.h.b16 %v202
    %v390 = vunpack.c.l.b16 %v203
    %v391 = vunpack.c.h.b16 %v203
    %v392 = vunpack.c.l.b16 %v204
    %v393 = vunpack.c.h.b16 %v204
    %v394 = vunpack.c.l.b16 %v205
    %v395 = vunpack.c.h.b16 %v205
    %v396 = vunpack.c.l.b16 %v206
    %v397 = vunpack.c.h.b16 %v206
    %v398 = vunpack.c.l.b16 %v207
    %v399 = vunpack.c.h.b16 %v207
    %v400 = vunpack.c.l.b16 %v208
    %v401 = vunpack.c.h.b16 %v208
    %v402 = vunpack.c.l.b16 %v209
    %v403 = vunpack.c.h.b16 %v209
    %v404 = vunpack.c.l.b16 %v210
    %v405 = vunpack.c.h.b16 %v210
    %v406 = vunpack.c.l.b16 %v211
    %v407 = vunpack.c.h.b16 %v211
    %v408 = vunpack.c.l.b16 %v212
    %v409 = vunpack.c.h.b16 %v212
    %v410 = vunpack.c.l.b16 %v213
    %v411 = vunpack.c.h.b16 %v213
    %v412 = vunpack.c.l.b16 %v214
    %v413 = vunpack.c.h.b16 %v214
    %v414 = vunpack.c.l.b16 %v215
    %v415 = vunpack.c.h.b16 %v215
    %v416 = vunpack.c.l.b16 %v216
    %v417 = vunpack.c.h.b16 %v216
    %v418 = vunpack.c.l.b16 %v217
    %v419 = vunpack.c.h.b16 %v217
    %v420 = vunpack.c.l.b16 %v218
    %v421 = vunpack.c.h.b16 %v218
    %v422 = vunpack.c.l.b16 %v219
    %v423 = vunpack.c.h.b16 %v219
    %v424 = vunpack.c.l.b16 %v220
    %v425 = vunpack.c.h.b16 %v220
    %v426 = vunpack.c.l.b16 %v221
    %v427 = vunpack.c.h.b16 %v221
    %v428 = vunpack.c.l.b16 %v222
    %v429 = vunpack.c.h.b16 %v222
    %v430 = vunpack.c.l.b16 %v223
    %v431 = vunpack.c.h.b16 %v223
    %v432 = vunpack.c.l.b16 %v224
    %v433 = vunpack.c.h.b16 %v224
    %v434 = vunpack.c.l.b16 %v225
    %v435 = vunpack.c.h.b16 %v225
    %v436 = vunpack.c.l.b16 %v226
    %v437 = vunpack.c.h.b16 %v226
    %v438 = vunpack.c.l.b16 %v227
    %v439 = vunpack.c.h.b16 %v227
    %v440 = vunpack.c.l.b16 %v228
    %v441 = vunpack.c.h.b16 %v228
    %v442 = vunpack.c.l.b16 %v229
    %v443 = vunpack.c.h.b16 %v229
    %v444 = vunpack.c.l.b16 %v230
    %v445 = vunpack.c.h.b16 %v230
    %v446 = vunpack.c.l.b16 %v231
    %v447 = vunpack.c.h.b16 %v231
    %v448 = vunpack.c.l.b16 %v232
    %v449 = vunpack.c.h.b16 %v232
    %v450 = vunpack.c.l.b16 %v233
    %v451 = vunpack.c.h.b16 %v233
    %v452 = vunpack.c.l.b16 %v234
    %v453 = vunpack.c.h.b16 %v234
    %v454 = vunpack.c.l.b16 %v235
    %v455 = vunpack.c.h.b16 %v235
    %v456 = vunpack.c.l.b16 %v236
    %v457 = vunpack.c.h.b16 %v236
    %v458 = vunpack.c.l.b16 %v237
    %v459 = vunpack.c.h.b16 %v237
    %v460 = vunpack.c.l.b16 %v238
    %v461 = vunpack.c.h.b16 %v238
    %v462 = vunpack.c.l.b16 %v239
    %v463 = vunpack.c.h.b16 %v239
    %v464 = vpack.c.b16 %v338, %v336
    %v465 = vpack.c.b16 %v339, %v337
    %v466 = vpack.c.b16 %v342, %v340
    %v467 = vpack.c.b16 %v343, %v341
    %v468 = vpack.c.b16 %v346, %v344
    %v469 = vpack.c.b16 %v347, %v345
    %v470 = vpack.c.b16 %v350, %v348
    %v471 = vpack.c.b16 %v351, %v349
    %v472 = vpack.c.b16 %v354, %v352
    %v473 = vpack.c.b16 %v355, %v353
    %v474 = vpack.c.b16 %v358, %v356
    %v475 = vpack.c.b16 %v359, %v357
    %v476 = vpack.c.b16 %v362, %v360
    %v477 = vpack.c.b16 %v363, %v361
    %v478 = vpack.c.b16 %v366, %v364
    %v479 = vpack.c.b16 %v367, %v365
    %v480 = vpack.c.b16 %v370, %v368
    %v481 = vpack.c.b16 %v371, %v369
    %v482 = vpack.c.b16 %v374, %v372
    %v483 = vpack.c.b16 %v375, %v373
    %v484 = vpack.c.b16 %v378, %v376
    %v485 = vpack.c.b16 %v379, %v377
    %v486 = vpack.c.b16 %v382, %v380
    %v487 = vpack.c.b16 %v383, %v381
    %v488 = vpack.c.b16 %v386, %v384
    %v489 = vpack.c.b16 %v387, %v385
    %v490 = vpack.c.b16 %v390, %v388
    %v491 = vpack.c.b16 %v391, %v389
    %v492 = vpack.c.b16 %v394, %v392
    %v493 = vpack.c.b16 %v395, %v393
    %v494 = vpack.c.b16 %v398, %v396
    %v495 = vpack.c.b16 %v399, %v397
    %v496 = vpack.c.b16 %v402, %v400
    %v497 = vpack.c.b16 %v403, %v401
    %v498 = vpack.c.b16 %v406, %v404
    %v499 = vpack.c.b16 %v407, %v405
    %v500 = vpack.c.b16 %v410, %v408
    %v501 = vpack.c.b16 %v411, %v409
    %v502 = vpack.c.b16 %v414, %v412
    %v503 = vpack.c.b16 %v415, %v413
    %v504 = vpack.c.b16 %v418, %v416
    %v505 = vpack.c.b16 %v419, %v417
    %v506 = vpack.c.b16 %v422, %v420
    %v507 = vpack.c.b16 %v423, %v421
    %v508 = vpack.c.b16 %v426, %v424
    %v509 = vpack.c.b16 %v427, %v425
    %v510 = vpack.c.b16 %v430, %v428
    %v511 = vpack.c.b16 %v431, %v429
    %v512 = vpack.c.b16 %v434, %v432
    %v513 = vpack.c.b16 %v435, %v433
    %v514 = vpack.c.b16 %v438, %v436
    %v515 = vpack.c.b16 %v439, %v437
    %v516 = vpack.c.b16 %v442, %v440
    %v517 = vpack.c.b16 %v443, %v441
    %v518 = vpack.c.b16 %v446, %v444
    %v519 = vpack.c.b16 %v447, %v445
    %v520 = vpack.c.b16 %v450, %v448
    %v521 = vpack.c.b16 %v451, %v449
    %v522 = vpack.c.b16 %v454, %v452
    %v523 = vpack.c.b16 %v455, %v453
    %v524 = vpack.c.b16 %v458, %v456
    %v525 = vpack.c.b16 %v459, %v457
    %v526 = vpack.c.b16 %v462, %v460
    %v527 = vpack.c.b16 %v463, %v461
    %v624 = vunpack.c.l.b16 %v240
    %v625 = vunpack.c.l.b16 %v241
    %v626 = vunpack.c.l.b16 %v242
    %v627 = vunpack.c.l.b16 %v243
    %v628 = vunpack.c.l.b16 %v244
    %v629 = vunpack.c.l.b16 %v245
    %v630 = vunpack.c.l.b16 %v246
    %v631 = vunpack.c.l.b16 %v247
    %v632 = vunpack.c.l.b16 %v248
    %v633 = vunpack.c.l.b16 %v249
    %v634 = vunpack.c.l.b16 %v250
    %v635 = vunpack.c.l.b16 %v251
    %v636 = vunpack.c.l.b16 %v252
    %v637 = vunpack.c.l.b16 %v253
    %v638 = vunpack.c.l.b16 %v254
    %v639 = vunpack.c.l.b16 %v255
    %v640 = vunpack.c.l.b16 %v256
    %v641 = vunpack.c.l.b16 %v257
    %v642 = vunpack.c.l.b16 %v258
    %v643 = vunpack.c.l.b16 %v259
    %v644 = vunpack.c.l.b16 %v260
    %v645 = vunpack.c.l.b16 %v261
    %v646 = vunpack.c.l.b16 %v262
    %v647 = vunpack.c.l.b16 %v263
    %v648 = vunpack.c.l.b16 %v264
    %v649 = vunpack.c.l.b16 %v265
    %v650 = vunpack.c.l.b16 %v266
    %v651 = vunpack.c.l.b16 %v267
    %v652 = vunpack.c.l.b16 %v268
    %v653 = vunpack.c.l.b16 %v269
    %v654 = vunpack.c.l.b16 %v270
    %v655 = vunpack.c.l.b16 %v271
    %v656 = vpack.c.b16 %v625, %v624
    %v657 = vpack.c.b16 %v627, %v626
    %v658 = vpack.c.b16 %v629, %v628
    %v659 = vpack.c.b16 %v631, %v630
    %v660 = vpack.c.b16 %v633, %v632
    %v661 = vpack.c.b16 %v635, %v634
    %v662 = vpack.c.b16 %v637, %v636
    %v663 = vpack.c.b16 %v639, %v638
    %v664 = vpack.c.b16 %v641, %v640
    %v665 = vpack.c.b16 %v643, %v642
    %v666 = vpack.c.b16 %v645, %v644
    %v667 = vpack.c.b16 %v647, %v646
    %v668 = vpack.c.b16 %v649, %v648
    %v669 = vpack.c.b16 %v651, %v650
    %v670 = vpack.c.b16 %v653, %v652
    %v671 = vpack.c.b16 %v655, %v654
    %688 = vmatprep.subr.bf16.mxu0 0
    %689 = vmatpush1.bf16.msra.mxu0 %v663
    %690 = vmatprep.subr.bf16.mxu0 0
    %691 = vmatpush1.bf16.msra.mxu0 %v662
    %692 = vmatprep.subr.bf16.mxu0 0
    %693 = vmatpush1.bf16.msra.mxu0 %v661
    %694 = vmatprep.subr.bf16.mxu0 0
    %695 = vmatpush1.bf16.msra.mxu0 %v660
    %696 = vmatprep.subr.bf16.mxu0 0
    %697 = vmatpush1.bf16.msra.mxu0 %v659
    %698 = vmatprep.subr.bf16.mxu0 0
    %699 = vmatpush1.bf16.msra.mxu0 %v658
    %700 = vmatprep.subr.bf16.mxu0 0
    %701 = vmatpush1.bf16.msra.mxu0 %v657
    %702 = vmatprep.subr.bf16.mxu0 0
    %703 = vmatpush1.bf16.msra.mxu0 %v656
    %704 = vmatprep.subr.bf16.mxu0 0
    %705 = vmatpush2.bf16.msra.mxu0 %v671
    %706 = vmatprep.subr.bf16.mxu0 0
    %707 = vmatpush2.bf16.msra.mxu0 %v670
    %708 = vmatprep.subr.bf16.mxu0 0
    %709 = vmatpush2.bf16.msra.mxu0 %v669
    %710 = vmatprep.subr.bf16.mxu0 0
    %711 = vmatpush2.bf16.msra.mxu0 %v668
    %712 = vmatprep.subr.bf16.mxu0 0
    %713 = vmatpush2.bf16.msra.mxu0 %v667
    %714 = vmatprep.subr.bf16.mxu0 0
    %715 = vmatpush2.bf16.msra.mxu0 %v666
    %716 = vmatprep.subr.bf16.mxu0 0
    %717 = vmatpush2.bf16.msra.mxu0 %v665
    %718 = vmatprep.subr.bf16.mxu0 0
    %719 = vmatpush2.bf16.msra.mxu0 %v664
    %720 = vmatprep.mubr.bf16.mxu0 %v465
    %721 = vmatmul.mubr.bf16.gmra.mxu0 %v464
    %v722 = vpop.f32.mrf.mxu0
    %v723 = vadd.f32 0.0, %v722
    %v724 = vpop.f32.mrf.mxu0
    %v725 = vpop.f32.mrf.mxu0
    %v726 = vadd.f32 0.0, %v725
    %v727 = vpop.f32.mrf.mxu0
    %728 = vmatprep.mubr.bf16.mxu0 %v467
    %729 = vmatmul.mubr.bf16.gmra.mxu0 %v466
    %v730 = vpop.f32.mrf.mxu0
    %v731 = vadd.f32 0.0, %v730
    %v732 = vpop.f32.mrf.mxu0
    %v733 = vpop.f32.mrf.mxu0
    %v734 = vadd.f32 0.0, %v733
    %v735 = vpop.f32.mrf.mxu0
    %736 = vmatprep.mubr.bf16.mxu0 %v469
    %737 = vmatmul.mubr.bf16.gmra.mxu0 %v468
    %v738 = vpop.f32.mrf.mxu0
    %v739 = vadd.f32 0.0, %v738
    %v740 = vpop.f32.mrf.mxu0
    %v741 = vpop.f32.mrf.mxu0
    %v742 = vadd.f32 0.0, %v741
    %v743 = vpop.f32.mrf.mxu0
    %744 = vmatprep.mubr.bf16.mxu0 %v471
    %745 = vmatmul.mubr.bf16.gmra.mxu0 %v470
    %v746 = vpop.f32.mrf.mxu0
    %v747 = vadd.f32 0.0, %v746
    %v748 = vpop.f32.mrf.mxu0
    %v749 = vpop.f32.mrf.mxu0
    %v750 = vadd.f32 0.0, %v749
    %v751 = vpop.f32.mrf.mxu0
    %752 = vmatprep.mubr.bf16.mxu0 %v473
    %753 = vmatmul.mubr.bf16.gmra.mxu0 %v472
    %v754 = vpop.f32.mrf.mxu0
    %v755 = vadd.f32 0.0, %v754
    %v756 = vpop.f32.mrf.mxu0
    %v757 = vpop.f32.mrf.mxu0
    %v758 = vadd.f32 0.0, %v757
    %v759 = vpop.f32.mrf.mxu0
    %760 = vmatprep.mubr.bf16.mxu0 %v475
    %761 = vmatmul.mubr.bf16.gmra.mxu0 %v474
    %v762 = vpop.f32.mrf.mxu0
    %v763 = vadd.f32 0.0, %v762
    %v764 = vpop.f32.mrf.mxu0
    %v765 = vpop.f32.mrf.mxu0
    %v766 = vadd.f32 0.0, %v765
    %v767 = vpop.f32.mrf.mxu0
    %768 = vmatprep.mubr.bf16.mxu0 %v477
    %769 = vmatmul.mubr.bf16.gmra.mxu0 %v476
    %v770 = vpop.f32.mrf.mxu0
    %v771 = vadd.f32 0.0, %v770
    %v772 = vpop.f32.mrf.mxu0
    %v773 = vpop.f32.mrf.mxu0
    %v774 = vadd.f32 0.0, %v773
    %v775 = vpop.f32.mrf.mxu0
    %776 = vmatprep.mubr.bf16.mxu0 %v479
    %777 = vmatmul.mubr.bf16.gmra.mxu0 %v478
    %v778 = vpop.f32.mrf.mxu0
    %v779 = vadd.f32 0.0, %v778
    %v780 = vpop.f32.mrf.mxu0
    %v781 = vpop.f32.mrf.mxu0
    %v782 = vadd.f32 0.0, %v781
    %v783 = vpop.f32.mrf.mxu0
    %784 = vmatprep.mubr.bf16.mxu0 %v481
    %785 = vmatmul.mubr.bf16.gmra.mxu0 %v480
    %v786 = vpop.f32.mrf.mxu0
    %v787 = vadd.f32 0.0, %v786
    %v788 = vpop.f32.mrf.mxu0
    %v789 = vpop.f32.mrf.mxu0
    %v790 = vadd.f32 0.0, %v789
    %v791 = vpop.f32.mrf.mxu0
    %792 = vmatprep.mubr.bf16.mxu0 %v483
    %793 = vmatmul.mubr.bf16.gmra.mxu0 %v482
    %v794 = vpop.f32.mrf.mxu0
    %v795 = vadd.f32 0.0, %v794
    %v796 = vpop.f32.mrf.mxu0
    %v797 = vpop.f32.mrf.mxu0
    %v798 = vadd.f32 0.0, %v797
    %v799 = vpop.f32.mrf.mxu0
    %800 = vmatprep.mubr.bf16.mxu0 %v485
    %801 = vmatmul.mubr.bf16.gmra.mxu0 %v484
    %v802 = vpop.f32.mrf.mxu0
    %v803 = vadd.f32 0.0, %v802
    %v804 = vpop.f32.mrf.mxu0
    %v805 = vpop.f32.mrf.mxu0
    %v806 = vadd.f32 0.0, %v805
    %v807 = vpop.f32.mrf.mxu0
    %808 = vmatprep.mubr.bf16.mxu0 %v487
    %809 = vmatmul.mubr.bf16.gmra.mxu0 %v486
    %v810 = vpop.f32.mrf.mxu0
    %v811 = vadd.f32 0.0, %v810
    %v812 = vpop.f32.mrf.mxu0
    %v813 = vpop.f32.mrf.mxu0
    %v814 = vadd.f32 0.0, %v813
    %v815 = vpop.f32.mrf.mxu0
    %816 = vmatprep.mubr.bf16.mxu0 %v489
    %817 = vmatmul.mubr.bf16.gmra.mxu0 %v488
    %v818 = vpop.f32.mrf.mxu0
    %v819 = vadd.f32 0.0, %v818
    %v820 = vpop.f32.mrf.mxu0
    %v821 = vpop.f32.mrf.mxu0
    %v822 = vadd.f32 0.0, %v821
    %v823 = vpop.f32.mrf.mxu0
    %824 = vmatprep.mubr.bf16.mxu0 %v491
    %825 = vmatmul.mubr.bf16.gmra.mxu0 %v490
    %v826 = vpop.f32.mrf.mxu0
    %v827 = vadd.f32 0.0, %v826
    %v828 = vpop.f32.mrf.mxu0
    %v829 = vpop.f32.mrf.mxu0
    %v830 = vadd.f32 0.0, %v829
    %v831 = vpop.f32.mrf.mxu0
    %832 = vmatprep.mubr.bf16.mxu0 %v493
    %833 = vmatmul.mubr.bf16.gmra.mxu0 %v492
    %v834 = vpop.f32.mrf.mxu0
    %v835 = vadd.f32 0.0, %v834
    %v836 = vpop.f32.mrf.mxu0
    %v837 = vpop.f32.mrf.mxu0
    %v838 = vadd.f32 0.0, %v837
    %v839 = vpop.f32.mrf.mxu0
    %840 = vmatprep.mubr.bf16.mxu0 %v495
    %841 = vmatmul.mubr.bf16.gmra.mxu0 %v494
    %v842 = vpop.f32.mrf.mxu0
    %v843 = vadd.f32 0.0, %v842
    %v844 = vpop.f32.mrf.mxu0
    %v845 = vpop.f32.mrf.mxu0
    %v846 = vadd.f32 0.0, %v845
    %v847 = vpop.f32.mrf.mxu0
    %848 = vmatprep.mubr.bf16.mxu0 %v497
    %849 = vmatmul.mubr.bf16.gmra.mxu0 %v496
    %v850 = vpop.f32.mrf.mxu0
    %v851 = vadd.f32 0.0, %v850
    %v852 = vpop.f32.mrf.mxu0
    %v853 = vpop.f32.mrf.mxu0
    %v854 = vadd.f32 0.0, %v853
    %v855 = vpop.f32.mrf.mxu0
    %856 = vmatprep.mubr.bf16.mxu0 %v499
    %857 = vmatmul.mubr.bf16.gmra.mxu0 %v498
    %v858 = vpop.f32.mrf.mxu0
    %v859 = vadd.f32 0.0, %v858
    %v860 = vpop.f32.mrf.mxu0
    %v861 = vpop.f32.mrf.mxu0
    %v862 = vadd.f32 0.0, %v861
    %v863 = vpop.f32.mrf.mxu0
    %864 = vmatprep.mubr.bf16.mxu0 %v501
    %865 = vmatmul.mubr.bf16.gmra.mxu0 %v500
    %v866 = vpop.f32.mrf.mxu0
    %v867 = vadd.f32 0.0, %v866
    %v868 = vpop.f32.mrf.mxu0
    %v869 = vpop.f32.mrf.mxu0
    %v870 = vadd.f32 0.0, %v869
    %v871 = vpop.f32.mrf.mxu0
    %872 = vmatprep.mubr.bf16.mxu0 %v503
    %873 = vmatmul.mubr.bf16.gmra.mxu0 %v502
    %v874 = vpop.f32.mrf.mxu0
    %v875 = vadd.f32 0.0, %v874
    %v876 = vpop.f32.mrf.mxu0
    %v877 = vpop.f32.mrf.mxu0
    %v878 = vadd.f32 0.0, %v877
    %v879 = vpop.f32.mrf.mxu0
    %880 = vmatprep.mubr.bf16.mxu0 %v505
    %881 = vmatmul.mubr.bf16.gmra.mxu0 %v504
    %v882 = vpop.f32.mrf.mxu0
    %v883 = vadd.f32 0.0, %v882
    %v884 = vpop.f32.mrf.mxu0
    %v885 = vpop.f32.mrf.mxu0
    %v886 = vadd.f32 0.0, %v885
    %v887 = vpop.f32.mrf.mxu0
    %888 = vmatprep.mubr.bf16.mxu0 %v507
    %889 = vmatmul.mubr.bf16.gmra.mxu0 %v506
    %v890 = vpop.f32.mrf.mxu0
    %v891 = vadd.f32 0.0, %v890
    %v892 = vpop.f32.mrf.mxu0
    %v893 = vpop.f32.mrf.mxu0
    %v894 = vadd.f32 0.0, %v893
    %v895 = vpop.f32.mrf.mxu0
    %896 = vmatprep.mubr.bf16.mxu0 %v509
    %897 = vmatmul.mubr.bf16.gmra.mxu0 %v508
    %v898 = vpop.f32.mrf.mxu0
    %v899 = vadd.f32 0.0, %v898
    %v900 = vpop.f32.mrf.mxu0
    %v901 = vpop.f32.mrf.mxu0
    %v902 = vadd.f32 0.0, %v901
    %v903 = vpop.f32.mrf.mxu0
    %904 = vmatprep.mubr.bf16.mxu0 %v511
    %905 = vmatmul.mubr.bf16.gmra.mxu0 %v510
    %v906 = vpop.f32.mrf.mxu0
    %v907 = vadd.f32 0.0, %v906
    %v908 = vpop.f32.mrf.mxu0
    %v909 = vpop.f32.mrf.mxu0
    %v910 = vadd.f32 0.0, %v909
    %v911 = vpop.f32.mrf.mxu0
    %912 = vmatprep.mubr.bf16.mxu0 %v513
    %913 = vmatmul.mubr.bf16.gmra.mxu0 %v512
    %v914 = vpop.f32.mrf.mxu0
    %v915 = vadd.f32 0.0, %v914
    %v916 = vpop.f32.mrf.mxu0
    %v917 = vpop.f32.mrf.mxu0
    %v918 = vadd.f32 0.0, %v917
    %v919 = vpop.f32.mrf.mxu0
    %920 = vmatprep.mubr.bf16.mxu0 %v515
    %921 = vmatmul.mubr.bf16.gmra.mxu0 %v514
    %v922 = vpop.f32.mrf.mxu0
    %v923 = vadd.f32 0.0, %v922
    %v924 = vpop.f32.mrf.mxu0
    %v925 = vpop.f32.mrf.mxu0
    %v926 = vadd.f32 0.0, %v925
    %v927 = vpop.f32.mrf.mxu0
    %928 = vmatprep.mubr.bf16.mxu0 %v517
    %929 = vmatmul.mubr.bf16.gmra.mxu0 %v516
    %v930 = vpop.f32.mrf.mxu0
    %v931 = vadd.f32 0.0, %v930
    %v932 = vpop.f32.mrf.mxu0
    %v933 = vpop.f32.mrf.mxu0
    %v934 = vadd.f32 0.0, %v933
    %v935 = vpop.f32.mrf.mxu0
    %936 = vmatprep.mubr.bf16.mxu0 %v519
    %937 = vmatmul.mubr.bf16.gmra.mxu0 %v518
    %v938 = vpop.f32.mrf.mxu0
    %v939 = vadd.f32 0.0, %v938
    %v940 = vpop.f32.mrf.mxu0
    %v941 = vpop.f32.mrf.mxu0
    %v942 = vadd.f32 0.0, %v941
    %v943 = vpop.f32.mrf.mxu0
    %944 = vmatprep.mubr.bf16.mxu0 %v521
    %945 = vmatmul.mubr.bf16.gmra.mxu0 %v520
    %v946 = vpop.f32.mrf.mxu0
    %v947 = vadd.f32 0.0, %v946
    %v948 = vpop.f32.mrf.mxu0
    %v949 = vpop.f32.mrf.mxu0
    %v950 = vadd.f32 0.0, %v949
    %v951 = vpop.f32.mrf.mxu0
    %952 = vmatprep.mubr.bf16.mxu0 %v523
    %953 = vmatmul.mubr.bf16.gmra.mxu0 %v522
    %v954 = vpop.f32.mrf.mxu0
    %v955 = vadd.f32 0.0, %v954
    %v956 = vpop.f32.mrf.mxu0
    %v957 = vpop.f32.mrf.mxu0
    %v958 = vadd.f32 0.0, %v957
    %v959 = vpop.f32.mrf.mxu0
    %960 = vmatprep.mubr.bf16.mxu0 %v525
    %961 = vmatmul.mubr.bf16.gmra.mxu0 %v524
    %v962 = vpop.f32.mrf.mxu0
    %v963 = vadd.f32 0.0, %v962
    %v964 = vpop.f32.mrf.mxu0
    %v965 = vpop.f32.mrf.mxu0
    %v966 = vadd.f32 0.0, %v965
    %v967 = vpop.f32.mrf.mxu0
    %968 = vmatprep.mubr.bf16.mxu0 %v527
    %969 = vmatmul.mubr.bf16.gmra.mxu0 %v526
    %v970 = vpop.f32.mrf.mxu0
    %v971 = vadd.f32 0.0, %v970
    %v972 = vpop.f32.mrf.mxu0
    %v973 = vpop.f32.mrf.mxu0
    %v974 = vadd.f32 0.0, %v973
    %v975 = vpop.f32.mrf.mxu0
    %976 = vdwg.mxu0
    %v977 = vadd.f32 %v112, %v723
    %v978 = vadd.f32 %v113, %v726
    %v979 = vadd.f32 %v114, %v731
    %v980 = vadd.f32 %v115, %v734
    %v981 = vadd.f32 %v116, %v739
    %v982 = vadd.f32 %v117, %v742
    %v983 = vadd.f32 %v118, %v747
    %v984 = vadd.f32 %v119, %v750
    %v985 = vadd.f32 %v120, %v755
    %v986 = vadd.f32 %v121, %v758
    %v987 = vadd.f32 %v122, %v763
    %v988 = vadd.f32 %v123, %v766
    %v989 = vadd.f32 %v124, %v771
    %v990 = vadd.f32 %v125, %v774
    %v991 = vadd.f32 %v126, %v779
    %v992 = vadd.f32 %v127, %v782
    %v993 = vadd.f32 %v128, %v787
    %v994 = vadd.f32 %v129, %v790
    %v995 = vadd.f32 %v130, %v795
    %v996 = vadd.f32 %v131, %v798
    %v997 = vadd.f32 %v132, %v803
    %v998 = vadd.f32 %v133, %v806
    %v999 = vadd.f32 %v134, %v811
    %v1000 = vadd.f32 %v135, %v814
    %v1001 = vadd.f32 %v136, %v819
    %v1002 = vadd.f32 %v137, %v822
    %v1003 = vadd.f32 %v138, %v827
    %v1004 = vadd.f32 %v139, %v830
    %v1005 = vadd.f32 %v140, %v835
    %v1006 = vadd.f32 %v141, %v838
    %v1007 = vadd.f32 %v142, %v843
    %v1008 = vadd.f32 %v143, %v846
    %v1009 = vadd.f32 %v144, %v851
    %v1010 = vadd.f32 %v145, %v854
    %v1011 = vadd.f32 %v146, %v859
    %v1012 = vadd.f32 %v147, %v862
    %v1013 = vadd.f32 %v148, %v867
    %v1014 = vadd.f32 %v149, %v870
    %v1015 = vadd.f32 %v150, %v875
    %v1016 = vadd.f32 %v151, %v878
    %v1017 = vadd.f32 %v152, %v883
    %v1018 = vadd.f32 %v153, %v886
    %v1019 = vadd.f32 %v154, %v891
    %v1020 = vadd.f32 %v155, %v894
    %v1021 = vadd.f32 %v156, %v899
    %v1022 = vadd.f32 %v157, %v902
    %v1023 = vadd.f32 %v158, %v907
    %v1024 = vadd.f32 %v159, %v910
    %v1025 = vadd.f32 %v160, %v915
    %v1026 = vadd.f32 %v161, %v918
    %v1027 = vadd.f32 %v162, %v923
    %v1028 = vadd.f32 %v163, %v926
    %v1029 = vadd.f32 %v164, %v931
    %v1030 = vadd.f32 %v165, %v934
    %v1031 = vadd.f32 %v166, %v939
    %v1032 = vadd.f32 %v167, %v942
    %v1033 = vadd.f32 %v168, %v947
    %v1034 = vadd.f32 %v169, %v950
    %v1035 = vadd.f32 %v170, %v955
    %v1036 = vadd.f32 %v171, %v958
    %v1037 = vadd.f32 %v172, %v963
    %v1038 = vadd.f32 %v173, %v966
    %v1039 = vadd.f32 %v174, %v971
    %v1040 = vadd.f32 %v175, %v974
    %1041 = vst [vmem:[#allocation7] sm:$0xff] %v977
    %1042 = vst [vmem:[#allocation7 + $0x8] sm:$0xff] %v978
    %1043 = vst [vmem:[#allocation7 + $0x10] sm:$0xff] %v979
    %1044 = vst [vmem:[#allocation7 + $0x18] sm:$0xff] %v980
    %1045 = vst [vmem:[#allocation7 + $0x20] sm:$0xff] %v981
    %1046 = vst [vmem:[#allocation7 + $0x28] sm:$0xff] %v982
    %1047 = vst [vmem:[#allocation7 + $0x30] sm:$0xff] %v983
    %1048 = vst [vmem:[#allocation7 + $0x38] sm:$0xff] %v984
    %1049 = vst [vmem:[#allocation7 + $0x40] sm:$0xff] %v985
    %1050 = vst [vmem:[#allocation7 + $0x48] sm:$0xff] %v986
    %1051 = vst [vmem:[#allocation7 + $0x50] sm:$0xff] %v987
    %1052 = vst [vmem:[#allocation7 + $0x58] sm:$0xff] %v988
    %1053 = vst [vmem:[#allocation7 + $0x60] sm:$0xff] %v989
    %1054 = vst [vmem:[#allocation7 + $0x68] sm:$0xff] %v990
    %1055 = vst [vmem:[#allocation7 + $0x70] sm:$0xff] %v991
    %1056 = vst [vmem:[#allocation7 + $0x78] sm:$0xff] %v992
    %1057 = vst [vmem:[#allocation7 + $0x80] sm:$0xff] %v993
    %1058 = vst [vmem:[#allocation7 + $0x88] sm:$0xff] %v994
    %1059 = vst [vmem:[#allocation7 + $0x90] sm:$0xff] %v995
    %1060 = vst [vmem:[#allocation7 + $0x98] sm:$0xff] %v996
    %1061 = vst [vmem:[#allocation7 + $0xa0] sm:$0xff] %v997
    %1062 = vst [vmem:[#allocation7 + $0xa8] sm:$0xff] %v998
    %1063 = vst [vmem:[#allocation7 + $0xb0] sm:$0xff] %v999
    %1064 = vst [vmem:[#allocation7 + $0xb8] sm:$0xff] %v1000
    %1065 = vst [vmem:[#allocation7 + $0xc0] sm:$0xff] %v1001
    %1066 = vst [vmem:[#allocation7 + $0xc8] sm:$0xff] %v1002
    %1067 = vst [vmem:[#allocation7 + $0xd0] sm:$0xff] %v1003
    %1068 = vst [vmem:[#allocation7 + $0xd8] sm:$0xff] %v1004
    %1069 = vst [vmem:[#allocation7 + $0xe0] sm:$0xff] %v1005
    %1070 = vst [vmem:[#allocation7 + $0xe8] sm:$0xff] %v1006
    %1071 = vst [vmem:[#allocation7 + $0xf0] sm:$0xff] %v1007
    %1072 = vst [vmem:[#allocation7 + $0xf8] sm:$0xff] %v1008
    %1073 = vst [vmem:[#allocation7 + $0x100] sm:$0xff] %v1009
    %1074 = vst [vmem:[#allocation7 + $0x108] sm:$0xff] %v1010
    %1075 = vst [vmem:[#allocation7 + $0x110] sm:$0xff] %v1011
    %1076 = vst [vmem:[#allocation7 + $0x118] sm:$0xff] %v1012
    %1077 = vst [vmem:[#allocation7 + $0x120] sm:$0xff] %v1013
    %1078 = vst [vmem:[#allocation7 + $0x128] sm:$0xff] %v1014
    %1079 = vst [vmem:[#allocation7 + $0x130] sm:$0xff] %v1015
    %1080 = vst [vmem:[#allocation7 + $0x138] sm:$0xff] %v1016
    %1081 = vst [vmem:[#allocation7 + $0x140] sm:$0xff] %v1017
    %1082 = vst [vmem:[#allocation7 + $0x148] sm:$0xff] %v1018
    %1083 = vst [vmem:[#allocation7 + $0x150] sm:$0xff] %v1019
    %1084 = vst [vmem:[#allocation7 + $0x158] sm:$0xff] %v1020
    %1085 = vst [vmem:[#allocation7 + $0x160] sm:$0xff] %v1021
    %1086 = vst [vmem:[#allocation7 + $0x168] sm:$0xff] %v1022
    %1087 = vst [vmem:[#allocation7 + $0x170] sm:$0xff] %v1023
    %1088 = vst [vmem:[#allocation7 + $0x178] sm:$0xff] %v1024
    %1089 = vst [vmem:[#allocation7 + $0x180] sm:$0xff] %v1025
    %1090 = vst [vmem:[#allocation7 + $0x188] sm:$0xff] %v1026
    %1091 = vst [vmem:[#allocation7 + $0x190] sm:$0xff] %v1027
    %1092 = vst [vmem:[#allocation7 + $0x198] sm:$0xff] %v1028
    %1093 = vst [vmem:[#allocation7 + $0x1a0] sm:$0xff] %v1029
    %1094 = vst [vmem:[#allocation7 + $0x1a8] sm:$0xff] %v1030
    %1095 = vst [vmem:[#allocation7 + $0x1b0] sm:$0xff] %v1031
    %1096 = vst [vmem:[#allocation7 + $0x1b8] sm:$0xff] %v1032
    %1097 = vst [vmem:[#allocation7 + $0x1c0] sm:$0xff] %v1033
    %1098 = vst [vmem:[#allocation7 + $0x1c8] sm:$0xff] %v1034
    %1099 = vst [vmem:[#allocation7 + $0x1d0] sm:$0xff] %v1035
    %1100 = vst [vmem:[#allocation7 + $0x1d8] sm:$0xff] %v1036
    %1101 = vst [vmem:[#allocation7 + $0x1e0] sm:$0xff] %v1037
    %1102 = vst [vmem:[#allocation7 + $0x1e8] sm:$0xff] %v1038
    %1103 = vst [vmem:[#allocation7 + $0x1f0] sm:$0xff] %v1039
    %1104 = vst [vmem:[#allocation7 + $0x1f8] sm:$0xff] %v1040
    // Predicated region
    $region26: #{tpu_custom_call.1} parent=1 // pred_check
      %p1105 = pneg %p44
    $region27: #{tpu_custom_call.1} parent=1 // pred_check_branch
      %1107 = sbr.rel (%p1105) target = $region29
    $region28: #{tpu_custom_call.1} parent=1 // pred_region
      %v1108 = vld [vmem:[#allocation7] sm:$0xff]
      %v1109 = vld [vmem:[#allocation7 + $0x8] sm:$0xff]
      %v1110 = vld [vmem:[#allocation7 + $0x10] sm:$0xff]
      %v1111 = vld [vmem:[#allocation7 + $0x18] sm:$0xff]
      %v1112 = vld [vmem:[#allocation7 + $0x20] sm:$0xff]
      %v1113 = vld [vmem:[#allocation7 + $0x28] sm:$0xff]
      %v1114 = vld [vmem:[#allocation7 + $0x30] sm:$0xff]
      %v1115 = vld [vmem:[#allocation7 + $0x38] sm:$0xff]
      %v1116 = vld [vmem:[#allocation7 + $0x40] sm:$0xff]
      %v1117 = vld [vmem:[#allocation7 + $0x48] sm:$0xff]
      %v1118 = vld [vmem:[#allocation7 + $0x50] sm:$0xff]
      %v1119 = vld [vmem:[#allocation7 + $0x58] sm:$0xff]
      %v1120 = vld [vmem:[#allocation7 + $0x60] sm:$0xff]
      %v1121 = vld [vmem:[#allocation7 + $0x68] sm:$0xff]
      %v1122 = vld [vmem:[#allocation7 + $0x70] sm:$0xff]
      %v1123 = vld [vmem:[#allocation7 + $0x78] sm:$0xff]
      %v1124 = vld [vmem:[#allocation7 + $0x80] sm:$0xff]
      %v1125 = vld [vmem:[#allocation7 + $0x88] sm:$0xff]
      %v1126 = vld [vmem:[#allocation7 + $0x90] sm:$0xff]
      %v1127 = vld [vmem:[#allocation7 + $0x98] sm:$0xff]
      %v1128 = vld [vmem:[#allocation7 + $0xa0] sm:$0xff]
      %v1129 = vld [vmem:[#allocation7 + $0xa8] sm:$0xff]
      %v1130 = vld [vmem:[#allocation7 + $0xb0] sm:$0xff]
      %v1131 = vld [vmem:[#allocation7 + $0xb8] sm:$0xff]
      %v1132 = vld [vmem:[#allocation7 + $0xc0] sm:$0xff]
      %v1133 = vld [vmem:[#allocation7 + $0xc8] sm:$0xff]
      %v1134 = vld [vmem:[#allocation7 + $0xd0] sm:$0xff]
      %v1135 = vld [vmem:[#allocation7 + $0xd8] sm:$0xff]
      %v1136 = vld [vmem:[#allocation7 + $0xe0] sm:$0xff]
      %v1137 = vld [vmem:[#allocation7 + $0xe8] sm:$0xff]
      %v1138 = vld [vmem:[#allocation7 + $0xf0] sm:$0xff]
      %v1139 = vld [vmem:[#allocation7 + $0xf8] sm:$0xff]
      %v1140 = vld [vmem:[#allocation7 + $0x100] sm:$0xff]
      %v1141 = vld [vmem:[#allocation7 + $0x108] sm:$0xff]
      %v1142 = vld [vmem:[#allocation7 + $0x110] sm:$0xff]
      %v1143 = vld [vmem:[#allocation7 + $0x118] sm:$0xff]
      %v1144 = vld [vmem:[#allocation7 + $0x120] sm:$0xff]
      %v1145 = vld [vmem:[#allocation7 + $0x128] sm:$0xff]
      %v1146 = vld [vmem:[#allocation7 + $0x130] sm:$0xff]
      %v1147 = vld [vmem:[#allocation7 + $0x138] sm:$0xff]
      %v1148 = vld [vmem:[#allocation7 + $0x140] sm:$0xff]
      %v1149 = vld [vmem:[#allocation7 + $0x148] sm:$0xff]
      %v1150 = vld [vmem:[#allocation7 + $0x150] sm:$0xff]
      %v1151 = vld [vmem:[#allocation7 + $0x158] sm:$0xff]
      %v1152 = vld [vmem:[#allocation7 + $0x160] sm:$0xff]
      %v1153 = vld [vmem:[#allocation7 + $0x168] sm:$0xff]
      %v1154 = vld [vmem:[#allocation7 + $0x170] sm:$0xff]
      %v1155 = vld [vmem:[#allocation7 + $0x178] sm:$0xff]
      %v1156 = vld [vmem:[#allocation7 + $0x180] sm:$0xff]
      %v1157 = vld [vmem:[#allocation7 + $0x188] sm:$0xff]
      %v1158 = vld [vmem:[#allocation7 + $0x190] sm:$0xff]
      %v1159 = vld [vmem:[#allocation7 + $0x198] sm:$0xff]
      %v1160 = vld [vmem:[#allocation7 + $0x1a0] sm:$0xff]
      %v1161 = vld [vmem:[#allocation7 + $0x1a8] sm:$0xff]
      %v1162 = vld [vmem:[#allocation7 + $0x1b0] sm:$0xff]
      %v1163 = vld [vmem:[#allocation7 + $0x1b8] sm:$0xff]
      %v1164 = vld [vmem:[#allocation7 + $0x1c0] sm:$0xff]
      %v1165 = vld [vmem:[#allocation7 + $0x1c8] sm:$0xff]
      %v1166 = vld [vmem:[#allocation7 + $0x1d0] sm:$0xff]
      %v1167 = vld [vmem:[#allocation7 + $0x1d8] sm:$0xff]
      %v1168 = vld [vmem:[#allocation7 + $0x1e0] sm:$0xff]
      %v1169 = vld [vmem:[#allocation7 + $0x1e8] sm:$0xff]
      %v1170 = vld [vmem:[#allocation7 + $0x1f0] sm:$0xff]
      %v1171 = vld [vmem:[#allocation7 + $0x1f8] sm:$0xff]
      %v1172 = vadd.f32 %v1108, %v1109
      %v1173 = vadd.f32 %v1172, %v1110
      %v1174 = vadd.f32 %v1173, %v1111
      %v1175 = vadd.f32 %v1174, %v1112
      %v1176 = vadd.f32 %v1175, %v1113
      %v1177 = vadd.f32 %v1176, %v1114
      %v1178 = vadd.f32 %v1177, %v1115
      %v1179 = vadd.f32 %v1178, %v1116
      %v1180 = vadd.f32 %v1179, %v1117
      %v1181 = vadd.f32 %v1180, %v1118
      %v1182 = vadd.f32 %v1181, %v1119
      %v1183 = vadd.f32 %v1182, %v1120
      %v1184 = vadd.f32 %v1183, %v1121
      %v1185 = vadd.f32 %v1184, %v1122
      %v1186 = vadd.f32 %v1185, %v1123
      %v1187 = vadd.f32 %v1186, %v1124
      %v1188 = vadd.f32 %v1187, %v1125
      %v1189 = vadd.f32 %v1188, %v1126
      %v1190 = vadd.f32 %v1189, %v1127
      %v1191 = vadd.f32 %v1190, %v1128
      %v1192 = vadd.f32 %v1191, %v1129
      %v1193 = vadd.f32 %v1192, %v1130
      %v1194 = vadd.f32 %v1193, %v1131
      %v1195 = vadd.f32 %v1194, %v1132
      %v1196 = vadd.f32 %v1195, %v1133
      %v1197 = vadd.f32 %v1196, %v1134
      %v1198 = vadd.f32 %v1197, %v1135
      %v1199 = vadd.f32 %v1198, %v1136
      %v1200 = vadd.f32 %v1199, %v1137
      %v1201 = vadd.f32 %v1200, %v1138
      %v1202 = vadd.f32 %v1201, %v1139
      %v1203 = vadd.f32 %v1202, %v1140
      %v1204 = vadd.f32 %v1203, %v1141
      %v1205 = vadd.f32 %v1204, %v1142
      %v1206 = vadd.f32 %v1205, %v1143
      %v1207 = vadd.f32 %v1206, %v1144
      %v1208 = vadd.f32 %v1207, %v1145
      %v1209 = vadd.f32 %v1208, %v1146
      %v1210 = vadd.f32 %v1209, %v1147
      %v1211 = vadd.f32 %v1210, %v1148
      %v1212 = vadd.f32 %v1211, %v1149
      %v1213 = vadd.f32 %v1212, %v1150
      %v1214 = vadd.f32 %v1213, %v1151
      %v1215 = vadd.f32 %v1214, %v1152
      %v1216 = vadd.f32 %v1215, %v1153
      %v1217 = vadd.f32 %v1216, %v1154
      %v1218 = vadd.f32 %v1217, %v1155
      %v1219 = vadd.f32 %v1218, %v1156
      %v1220 = vadd.f32 %v1219, %v1157
      %v1221 = vadd.f32 %v1220, %v1158
      %v1222 = vadd.f32 %v1221, %v1159
      %v1223 = vadd.f32 %v1222, %v1160
      %v1224 = vadd.f32 %v1223, %v1161
      %v1225 = vadd.f32 %v1224, %v1162
      %v1226 = vadd.f32 %v1225, %v1163
      %v1227 = vadd.f32 %v1226, %v1164
      %v1228 = vadd.f32 %v1227, %v1165
      %v1229 = vadd.f32 %v1228, %v1166
      %v1230 = vadd.f32 %v1229, %v1167
      %v1231 = vadd.f32 %v1230, %v1168
      %v1232 = vadd.f32 %v1231, %v1169
      %v1233 = vadd.f32 %v1232, %v1170
      %v1234 = vadd.f32 %v1233, %v1171
      %v1235 = vrot.slane %v1234, 4
      %v1236 = vadd.f32 %v1234, %v1235
      %v1237 = vrot.slane %v1236, 2
      %v1238 = vadd.f32 %v1236, %v1237
      %v1239 = vrot.slane %v1238, 1
      %v1240 = vadd.f32 %v1238, %v1239
      %v1241 = vrcp.pop 512.0
      %v1242 = vmul.f32 %v1240, %v1241
      %v1243 = vmul.f32 %v1108, %v1108
      %v1244 = vmul.f32 %v1109, %v1109
      %v1245 = vmul.f32 %v1110, %v1110
      %v1246 = vmul.f32 %v1111, %v1111
      %v1247 = vmul.f32 %v1112, %v1112
      %v1248 = vmul.f32 %v1113, %v1113
      %v1249 = vmul.f32 %v1114, %v1114
      %v1250 = vmul.f32 %v1115, %v1115
      %v1251 = vmul.f32 %v1116, %v1116
      %v1252 = vmul.f32 %v1117, %v1117
      %v1253 = vmul.f32 %v1118, %v1118
      %v1254 = vmul.f32 %v1119, %v1119
      %v1255 = vmul.f32 %v1120, %v1120
      %v1256 = vmul.f32 %v1121, %v1121
      %v1257 = vmul.f32 %v1122, %v1122
      %v1258 = vmul.f32 %v1123, %v1123
      %v1259 = vmul.f32 %v1124, %v1124
      %v1260 = vmul.f32 %v1125, %v1125
      %v1261 = vmul.f32 %v1126, %v1126
      %v1262 = vmul.f32 %v1127, %v1127
      %v1263 = vmul.f32 %v1128, %v1128
      %v1264 = vmul.f32 %v1129, %v1129
      %v1265 = vmul.f32 %v1130, %v1130
      %v1266 = vmul.f32 %v1131, %v1131
      %v1267 = vmul.f32 %v1132, %v1132
      %v1268 = vmul.f32 %v1133, %v1133
      %v1269 = vmul.f32 %v1134, %v1134
      %v1270 = vmul.f32 %v1135, %v1135
      %v1271 = vmul.f32 %v1136, %v1136
      %v1272 = vmul.f32 %v1137, %v1137
      %v1273 = vmul.f32 %v1138, %v1138
      %v1274 = vmul.f32 %v1139, %v1139
      %v1275 = vmul.f32 %v1140, %v1140
      %v1276 = vmul.f32 %v1141, %v1141
      %v1277 = vmul.f32 %v1142, %v1142
      %v1278 = vmul.f32 %v1143, %v1143
      %v1279 = vmul.f32 %v1144, %v1144
      %v1280 = vmul.f32 %v1145, %v1145
      %v1281 = vmul.f32 %v1146, %v1146
      %v1282 = vmul.f32 %v1147, %v1147
      %v1283 = vmul.f32 %v1148, %v1148
      %v1284 = vmul.f32 %v1149, %v1149
      %v1285 = vmul.f32 %v1150, %v1150
      %v1286 = vmul.f32 %v1151, %v1151
      %v1287 = vmul.f32 %v1152, %v1152
      %v1288 = vmul.f32 %v1153, %v1153
      %v1289 = vmul.f32 %v1154, %v1154
      %v1290 = vmul.f32 %v1155, %v1155
      %v1291 = vmul.f32 %v1156, %v1156
      %v1292 = vmul.f32 %v1157, %v1157
      %v1293 = vmul.f32 %v1158, %v1158
      %v1294 = vmul.f32 %v1159, %v1159
      %v1295 = vmul.f32 %v1160, %v1160
      %v1296 = vmul.f32 %v1161, %v1161
      %v1297 = vmul.f32 %v1162, %v1162
      %v1298 = vmul.f32 %v1163, %v1163
      %v1299 = vmul.f32 %v1164, %v1164
      %v1300 = vmul.f32 %v1165, %v1165
      %v1301 = vmul.f32 %v1166, %v1166
      %v1302 = vmul.f32 %v1167, %v1167
      %v1303 = vmul.f32 %v1168, %v1168
      %v1304 = vmul.f32 %v1169, %v1169
      %v1305 = vmul.f32 %v1170, %v1170
      %v1306 = vmul.f32 %v1171, %v1171
      %v1307 = vadd.f32 %v1243, %v1244
      %v1308 = vadd.f32 %v1307, %v1245
      %v1309 = vadd.f32 %v1308, %v1246
      %v1310 = vadd.f32 %v1309, %v1247
      %v1311 = vadd.f32 %v1310, %v1248
      %v1312 = vadd.f32 %v1311, %v1249
      %v1313 = vadd.f32 %v1312, %v1250
      %v1314 = vadd.f32 %v1313, %v1251
      %v1315 = vadd.f32 %v1314, %v1252
      %v1316 = vadd.f32 %v1315, %v1253
      %v1317 = vadd.f32 %v1316, %v1254
      %v1318 = vadd.f32 %v1317, %v1255
      %v1319 = vadd.f32 %v1318, %v1256
      %v1320 = vadd.f32 %v1319, %v1257
      %v1321 = vadd.f32 %v1320, %v1258
      %v1322 = vadd.f32 %v1321, %v1259
      %v1323 = vadd.f32 %v1322, %v1260
      %v1324 = vadd.f32 %v1323, %v1261
      %v1325 = vadd.f32 %v1324, %v1262
      %v1326 = vadd.f32 %v1325, %v1263
      %v1327 = vadd.f32 %v1326, %v1264
      %v1328 = vadd.f32 %v1327, %v1265
      %v1329 = vadd.f32 %v1328, %v1266
      %v1330 = vadd.f32 %v1329, %v1267
      %v1331 = vadd.f32 %v1330, %v1268
      %v1332 = vadd.f32 %v1331, %v1269
      %v1333 = vadd.f32 %v1332, %v1270
      %v1334 = vadd.f32 %v1333, %v1271
      %v1335 = vadd.f32 %v1334, %v1272
      %v1336 = vadd.f32 %v1335, %v1273
      %v1337 = vadd.f32 %v1336, %v1274
      %v1338 = vadd.f32 %v1337, %v1275
      %v1339 = vadd.f32 %v1338, %v1276
      %v1340 = vadd.f32 %v1339, %v1277
      %v1341 = vadd.f32 %v1340, %v1278
      %v1342 = vadd.f32 %v1341, %v1279
      %v1343 = vadd.f32 %v1342, %v1280
      %v1344 = vadd.f32 %v1343, %v1281
      %v1345 = vadd.f32 %v1344, %v1282
      %v1346 = vadd.f32 %v1345, %v1283
      %v1347 = vadd.f32 %v1346, %v1284
      %v1348 = vadd.f32 %v1347, %v1285
      %v1349 = vadd.f32 %v1348, %v1286
      %v1350 = vadd.f32 %v1349, %v1287
      %v1351 = vadd.f32 %v1350, %v1288
      %v1352 = vadd.f32 %v1351, %v1289
      %v1353 = vadd.f32 %v1352, %v1290
      %v1354 = vadd.f32 %v1353, %v1291
      %v1355 = vadd.f32 %v1354, %v1292
      %v1356 = vadd.f32 %v1355, %v1293
      %v1357 = vadd.f32 %v1356, %v1294
      %v1358 = vadd.f32 %v1357, %v1295
      %v1359 = vadd.f32 %v1358, %v1296
      %v1360 = vadd.f32 %v1359, %v1297
      %v1361 = vadd.f32 %v1360, %v1298
      %v1362 = vadd.f32 %v1361, %v1299
      %v1363 = vadd.f32 %v1362, %v1300
      %v1364 = vadd.f32 %v1363, %v1301
      %v1365 = vadd.f32 %v1364, %v1302
      %v1366 = vadd.f32 %v1365, %v1303
      %v1367 = vadd.f32 %v1366, %v1304
      %v1368 = vadd.f32 %v1367, %v1305
      %v1369 = vadd.f32 %v1368, %v1306
      %v1370 = vrot.slane %v1369, 4
      %v1371 = vadd.f32 %v1369, %v1370
      %v1372 = vrot.slane %v1371, 2
      %v1373 = vadd.f32 %v1371, %v1372
      %v1374 = vrot.slane %v1373, 1
      %v1375 = vadd.f32 %v1373, %v1374
      %v1376 = vmul.f32 %v1375, %v1241
      %v1377 = vmul.f32 %v1242, %v1242
      %v1378 = vsub.f32 %v1376, %v1377
      %v1379 = vmax.f32 %v1378, 0.0
      %v1380 = vsub.f32 %v1108, %v1242
      %v1381 = vsub.f32 %v1109, %v1242
      %v1382 = vsub.f32 %v1110, %v1242
      %v1383 = vsub.f32 %v1111, %v1242
      %v1384 = vsub.f32 %v1112, %v1242
      %v1385 = vsub.f32 %v1113, %v1242
      %v1386 = vsub.f32 %v1114, %v1242
      %v1387 = vsub.f32 %v1115, %v1242
      %v1388 = vsub.f32 %v1116, %v1242
      %v1389 = vsub.f32 %v1117, %v1242
      %v1390 = vsub.f32 %v1118, %v1242
      %v1391 = vsub.f32 %v1119, %v1242
      %v1392 = vsub.f32 %v1120, %v1242
      %v1393 = vsub.f32 %v1121, %v1242
      %v1394 = vsub.f32 %v1122, %v1242
      %v1395 = vsub.f32 %v1123, %v1242
      %v1396 = vsub.f32 %v1124, %v1242
      %v1397 = vsub.f32 %v1125, %v1242
      %v1398 = vsub.f32 %v1126, %v1242
      %v1399 = vsub.f32 %v1127, %v1242
      %v1400 = vsub.f32 %v1128, %v1242
      %v1401 = vsub.f32 %v1129, %v1242
      %v1402 = vsub.f32 %v1130, %v1242
      %v1403 = vsub.f32 %v1131, %v1242
      %v1404 = vsub.f32 %v1132, %v1242
      %v1405 = vsub.f32 %v1133, %v1242
      %v1406 = vsub.f32 %v1134, %v1242
      %v1407 = vsub.f32 %v1135, %v1242
      %v1408 = vsub.f32 %v1136, %v1242
      %v1409 = vsub.f32 %v1137, %v1242
      %v1410 = vsub.f32 %v1138, %v1242
      %v1411 = vsub.f32 %v1139, %v1242
      %v1412 = vsub.f32 %v1140, %v1242
      %v1413 = vsub.f32 %v1141, %v1242
      %v1414 = vsub.f32 %v1142, %v1242
      %v1415 = vsub.f32 %v1143, %v1242
      %v1416 = vsub.f32 %v1144, %v1242
      %v1417 = vsub.f32 %v1145, %v1242
      %v1418 = vsub.f32 %v1146, %v1242
      %v1419 = vsub.f32 %v1147, %v1242
      %v1420 = vsub.f32 %v1148, %v1242
      %v1421 = vsub.f32 %v1149, %v1242
      %v1422 = vsub.f32 %v1150, %v1242
      %v1423 = vsub.f32 %v1151, %v1242
      %v1424 = vsub.f32 %v1152, %v1242
      %v1425 = vsub.f32 %v1153, %v1242
      %v1426 = vsub.f32 %v1154, %v1242
      %v1427 = vsub.f32 %v1155, %v1242
      %v1428 = vsub.f32 %v1156, %v1242
      %v1429 = vsub.f32 %v1157, %v1242
      %v1430 = vsub.f32 %v1158, %v1242
      %v1431 = vsub.f32 %v1159, %v1242
      %v1432 = vsub.f32 %v1160, %v1242
      %v1433 = vsub.f32 %v1161, %v1242
      %v1434 = vsub.f32 %v1162, %v1242
      %v1435 = vsub.f32 %v1163, %v1242
      %v1436 = vsub.f32 %v1164, %v1242
      %v1437 = vsub.f32 %v1165, %v1242
      %v1438 = vsub.f32 %v1166, %v1242
      %v1439 = vsub.f32 %v1167, %v1242
      %v1440 = vsub.f32 %v1168, %v1242
      %v1441 = vsub.f32 %v1169, %v1242
      %v1442 = vsub.f32 %v1170, %v1242
      %v1443 = vsub.f32 %v1171, %v1242
      %v1444 = vadd.f32 %v1379, 1e-05
      %v1445 = vrsqrt.pop %v1444
      %v1446 = vmul.f32 %v1380, %v1445
      %v1447 = vmul.f32 %v1381, %v1445
      %v1448 = vmul.f32 %v1382, %v1445
      %v1449 = vmul.f32 %v1383, %v1445
      %v1450 = vmul.f32 %v1384, %v1445
      %v1451 = vmul.f32 %v1385, %v1445
      %v1452 = vmul.f32 %v1386, %v1445
      %v1453 = vmul.f32 %v1387, %v1445
      %v1454 = vmul.f32 %v1388, %v1445
      %v1455 = vmul.f32 %v1389, %v1445
      %v1456 = vmul.f32 %v1390, %v1445
      %v1457 = vmul.f32 %v1391, %v1445
      %v1458 = vmul.f32 %v1392, %v1445
      %v1459 = vmul.f32 %v1393, %v1445
      %v1460 = vmul.f32 %v1394, %v1445
      %v1461 = vmul.f32 %v1395, %v1445
      %v1462 = vmul.f32 %v1396, %v1445
      %v1463 = vmul.f32 %v1397, %v1445
      %v1464 = vmul.f32 %v1398, %v1445
      %v1465 = vmul.f32 %v1399, %v1445
      %v1466 = vmul.f32 %v1400, %v1445
      %v1467 = vmul.f32 %v1401, %v1445
      %v1468 = vmul.f32 %v1402, %v1445
      %v1469 = vmul.f32 %v1403, %v1445
      %v1470 = vmul.f32 %v1404, %v1445
      %v1471 = vmul.f32 %v1405, %v1445
      %v1472 = vmul.f32 %v1406, %v1445
      %v1473 = vmul.f32 %v1407, %v1445
      %v1474 = vmul.f32 %v1408, %v1445
      %v1475 = vmul.f32 %v1409, %v1445
      %v1476 = vmul.f32 %v1410, %v1445
      %v1477 = vmul.f32 %v1411, %v1445
      %v1478 = vmul.f32 %v1412, %v1445
      %v1479 = vmul.f32 %v1413, %v1445
      %v1480 = vmul.f32 %v1414, %v1445
      %v1481 = vmul.f32 %v1415, %v1445
      %v1482 = vmul.f32 %v1416, %v1445
      %v1483 = vmul.f32 %v1417, %v1445
      %v1484 = vmul.f32 %v1418, %v1445
      %v1485 = vmul.f32 %v1419, %v1445
      %v1486 = vmul.f32 %v1420, %v1445
      %v1487 = vmul.f32 %v1421, %v1445
      %v1488 = vmul.f32 %v1422, %v1445
      %v1489 = vmul.f32 %v1423, %v1445
      %v1490 = vmul.f32 %v1424, %v1445
      %v1491 = vmul.f32 %v1425, %v1445
      %v1492 = vmul.f32 %v1426, %v1445
      %v1493 = vmul.f32 %v1427, %v1445
      %v1494 = vmul.f32 %v1428, %v1445
      %v1495 = vmul.f32 %v1429, %v1445
      %v1496 = vmul.f32 %v1430, %v1445
      %v1497 = vmul.f32 %v1431, %v1445
      %v1498 = vmul.f32 %v1432, %v1445
      %v1499 = vmul.f32 %v1433, %v1445
      %v1500 = vmul.f32 %v1434, %v1445
      %v1501 = vmul.f32 %v1435, %v1445
      %v1502 = vmul.f32 %v1436, %v1445
      %v1503 = vmul.f32 %v1437, %v1445
      %v1504 = vmul.f32 %v1438, %v1445
      %v1505 = vmul.f32 %v1439, %v1445
      %v1506 = vmul.f32 %v1440, %v1445
      %v1507 = vmul.f32 %v1441, %v1445
      %v1508 = vmul.f32 %v1442, %v1445
      %v1509 = vmul.f32 %v1443, %v1445
      %v1510 = vld [vmem:[%s2] sm:$0x1]
      %v1511 = vlaneseq
      %v1512 = vshrl.u32 %v1511, 7
      %v1513 = vsub.s32 0, %v1512
      %v1514 = vrot.slane %v1510, %v1513
      %v1515 = vmul.f32 %v1446, %v1514
      %v1516 = vmul.f32 %v1447, %v1514
      %v1517 = vmul.f32 %v1448, %v1514
      %v1518 = vmul.f32 %v1449, %v1514
      %v1519 = vmul.f32 %v1450, %v1514
      %v1520 = vmul.f32 %v1451, %v1514
      %v1521 = vmul.f32 %v1452, %v1514
      %v1522 = vmul.f32 %v1453, %v1514
      %v1523 = vmul.f32 %v1454, %v1514
      %v1524 = vmul.f32 %v1455, %v1514
      %v1525 = vmul.f32 %v1456, %v1514
      %v1526 = vmul.f32 %v1457, %v1514
      %v1527 = vmul.f32 %v1458, %v1514
      %v1528 = vmul.f32 %v1459, %v1514
      %v1529 = vmul.f32 %v1460, %v1514
      %v1530 = vmul.f32 %v1461, %v1514
      %v1531 = vmul.f32 %v1462, %v1514
      %v1532 = vmul.f32 %v1463, %v1514
      %v1533 = vmul.f32 %v1464, %v1514
      %v1534 = vmul.f32 %v1465, %v1514
      %v1535 = vmul.f32 %v1466, %v1514
      %v1536 = vmul.f32 %v1467, %v1514
      %v1537 = vmul.f32 %v1468, %v1514
      %v1538 = vmul.f32 %v1469, %v1514
      %v1539 = vmul.f32 %v1470, %v1514
      %v1540 = vmul.f32 %v1471, %v1514
      %v1541 = vmul.f32 %v1472, %v1514
      %v1542 = vmul.f32 %v1473, %v1514
      %v1543 = vmul.f32 %v1474, %v1514
      %v1544 = vmul.f32 %v1475, %v1514
      %v1545 = vmul.f32 %v1476, %v1514
      %v1546 = vmul.f32 %v1477, %v1514
      %v1547 = vmul.f32 %v1478, %v1514
      %v1548 = vmul.f32 %v1479, %v1514
      %v1549 = vmul.f32 %v1480, %v1514
      %v1550 = vmul.f32 %v1481, %v1514
      %v1551 = vmul.f32 %v1482, %v1514
      %v1552 = vmul.f32 %v1483, %v1514
      %v1553 = vmul.f32 %v1484, %v1514
      %v1554 = vmul.f32 %v1485, %v1514
      %v1555 = vmul.f32 %v1486, %v1514
      %v1556 = vmul.f32 %v1487, %v1514
      %v1557 = vmul.f32 %v1488, %v1514
      %v1558 = vmul.f32 %v1489, %v1514
      %v1559 = vmul.f32 %v1490, %v1514
      %v1560 = vmul.f32 %v1491, %v1514
      %v1561 = vmul.f32 %v1492, %v1514
      %v1562 = vmul.f32 %v1493, %v1514
      %v1563 = vmul.f32 %v1494, %v1514
      %v1564 = vmul.f32 %v1495, %v1514
      %v1565 = vmul.f32 %v1496, %v1514
      %v1566 = vmul.f32 %v1497, %v1514
      %v1567 = vmul.f32 %v1498, %v1514
      %v1568 = vmul.f32 %v1499, %v1514
      %v1569 = vmul.f32 %v1500, %v1514
      %v1570 = vmul.f32 %v1501, %v1514
      %v1571 = vmul.f32 %v1502, %v1514
      %v1572 = vmul.f32 %v1503, %v1514
      %v1573 = vmul.f32 %v1504, %v1514
      %v1574 = vmul.f32 %v1505, %v1514
      %v1575 = vmul.f32 %v1506, %v1514
      %v1576 = vmul.f32 %v1507, %v1514
      %v1577 = vmul.f32 %v1508, %v1514
      %v1578 = vmul.f32 %v1509, %v1514
      %v1579 = vld [vmem:[%s2 + $0x1] sm:$0x1]
      %v1580 = vlaneseq
      %v1581 = vshrl.u32 %v1580, 7
      %v1582 = vsub.s32 0, %v1581
      %v1583 = vrot.slane %v1579, %v1582
      %v1584 = vadd.f32 %v1515, %v1583
      %v1585 = vadd.f32 %v1516, %v1583
      %v1586 = vadd.f32 %v1517, %v1583
      %v1587 = vadd.f32 %v1518, %v1583
      %v1588 = vadd.f32 %v1519, %v1583
      %v1589 = vadd.f32 %v1520, %v1583
      %v1590 = vadd.f32 %v1521, %v1583
      %v1591 = vadd.f32 %v1522, %v1583
      %v1592 = vadd.f32 %v1523, %v1583
      %v1593 = vadd.f32 %v1524, %v1583
      %v1594 = vadd.f32 %v1525, %v1583
      %v1595 = vadd.f32 %v1526, %v1583
      %v1596 = vadd.f32 %v1527, %v1583
      %v1597 = vadd.f32 %v1528, %v1583
      %v1598 = vadd.f32 %v1529, %v1583
      %v1599 = vadd.f32 %v1530, %v1583
      %v1600 = vadd.f32 %v1531, %v1583
      %v1601 = vadd.f32 %v1532, %v1583
      %v1602 = vadd.f32 %v1533, %v1583
      %v1603 = vadd.f32 %v1534, %v1583
      %v1604 = vadd.f32 %v1535, %v1583
      %v1605 = vadd.f32 %v1536, %v1583
      %v1606 = vadd.f32 %v1537, %v1583
      %v1607 = vadd.f32 %v1538, %v1583
      %v1608 = vadd.f32 %v1539, %v1583
      %v1609 = vadd.f32 %v1540, %v1583
      %v1610 = vadd.f32 %v1541, %v1583
      %v1611 = vadd.f32 %v1542, %v1583
      %v1612 = vadd.f32 %v1543, %v1583
      %v1613 = vadd.f32 %v1544, %v1583
      %v1614 = vadd.f32 %v1545, %v1583
      %v1615 = vadd.f32 %v1546, %v1583
      %v1616 = vadd.f32 %v1547, %v1583
      %v1617 = vadd.f32 %v1548, %v1583
      %v1618 = vadd.f32 %v1549, %v1583
      %v1619 = vadd.f32 %v1550, %v1583
      %v1620 = vadd.f32 %v1551, %v1583
      %v1621 = vadd.f32 %v1552, %v1583
      %v1622 = vadd.f32 %v1553, %v1583
      %v1623 = vadd.f32 %v1554, %v1583
      %v1624 = vadd.f32 %v1555, %v1583
      %v1625 = vadd.f32 %v1556, %v1583
      %v1626 = vadd.f32 %v1557, %v1583
      %v1627 = vadd.f32 %v1558, %v1583
      %v1628 = vadd.f32 %v1559, %v1583
      %v1629 = vadd.f32 %v1560, %v1583
      %v1630 = vadd.f32 %v1561, %v1583
      %v1631 = vadd.f32 %v1562, %v1583
      %v1632 = vadd.f32 %v1563, %v1583
      %v1633 = vadd.f32 %v1564, %v1583
      %v1634 = vadd.f32 %v1565, %v1583
      %v1635 = vadd.f32 %v1566, %v1583
      %v1636 = vadd.f32 %v1567, %v1583
      %v1637 = vadd.f32 %v1568, %v1583
      %v1638 = vadd.f32 %v1569, %v1583
      %v1639 = vadd.f32 %v1570, %v1583
      %v1640 = vadd.f32 %v1571, %v1583
      %v1641 = vadd.f32 %v1572, %v1583
      %v1642 = vadd.f32 %v1573, %v1583
      %v1643 = vadd.f32 %v1574, %v1583
      %v1644 = vadd.f32 %v1575, %v1583
      %v1645 = vadd.f32 %v1576, %v1583
      %v1646 = vadd.f32 %v1577, %v1583
      %v1647 = vadd.f32 %v1578, %v1583
      %v1648 = vmax.f32 %v1584, 0.0
      %v1649 = vmax.f32 %v1585, 0.0
      %v1650 = vmax.f32 %v1586, 0.0
      %v1651 = vmax.f32 %v1587, 0.0
      %v1652 = vmax.f32 %v1588, 0.0
      %v1653 = vmax.f32 %v1589, 0.0
      %v1654 = vmax.f32 %v1590, 0.0
      %v1655 = vmax.f32 %v1591, 0.0
      %v1656 = vmax.f32 %v1592, 0.0
      %v1657 = vmax.f32 %v1593, 0.0
      %v1658 = vmax.f32 %v1594, 0.0
      %v1659 = vmax.f32 %v1595, 0.0
      %v1660 = vmax.f32 %v1596, 0.0
      %v1661 = vmax.f32 %v1597, 0.0
      %v1662 = vmax.f32 %v1598, 0.0
      %v1663 = vmax.f32 %v1599, 0.0
      %v1664 = vmax.f32 %v1600, 0.0
      %v1665 = vmax.f32 %v1601, 0.0
      %v1666 = vmax.f32 %v1602, 0.0
      %v1667 = vmax.f32 %v1603, 0.0
      %v1668 = vmax.f32 %v1604, 0.0
      %v1669 = vmax.f32 %v1605, 0.0
      %v1670 = vmax.f32 %v1606, 0.0
      %v1671 = vmax.f32 %v1607, 0.0
      %v1672 = vmax.f32 %v1608, 0.0
      %v1673 = vmax.f32 %v1609, 0.0
      %v1674 = vmax.f32 %v1610, 0.0
      %v1675 = vmax.f32 %v1611, 0.0
      %v1676 = vmax.f32 %v1612, 0.0
      %v1677 = vmax.f32 %v1613, 0.0
      %v1678 = vmax.f32 %v1614, 0.0
      %v1679 = vmax.f32 %v1615, 0.0
      %v1680 = vmax.f32 %v1616, 0.0
      %v1681 = vmax.f32 %v1617, 0.0
      %v1682 = vmax.f32 %v1618, 0.0
      %v1683 = vmax.f32 %v1619, 0.0
      %v1684 = vmax.f32 %v1620, 0.0
      %v1685 = vmax.f32 %v1621, 0.0
      %v1686 = vmax.f32 %v1622, 0.0
      %v1687 = vmax.f32 %v1623, 0.0
      %v1688 = vmax.f32 %v1624, 0.0
      %v1689 = vmax.f32 %v1625, 0.0
      %v1690 = vmax.f32 %v1626, 0.0
      %v1691 = vmax.f32 %v1627, 0.0
      %v1692 = vmax.f32 %v1628, 0.0
      %v1693 = vmax.f32 %v1629, 0.0
      %v1694 = vmax.f32 %v1630, 0.0
      %v1695 = vmax.f32 %v1631, 0.0
      %v1696 = vmax.f32 %v1632, 0.0
      %v1697 = vmax.f32 %v1633, 0.0
      %v1698 = vmax.f32 %v1634, 0.0
      %v1699 = vmax.f32 %v1635, 0.0
      %v1700 = vmax.f32 %v1636, 0.0
      %v1701 = vmax.f32 %v1637, 0.0
      %v1702 = vmax.f32 %v1638, 0.0
      %v1703 = vmax.f32 %v1639, 0.0
      %v1704 = vmax.f32 %v1640, 0.0
      %v1705 = vmax.f32 %v1641, 0.0
      %v1706 = vmax.f32 %v1642, 0.0
      %v1707 = vmax.f32 %v1643, 0.0
      %v1708 = vmax.f32 %v1644, 0.0
      %v1709 = vmax.f32 %v1645, 0.0
      %v1710 = vmax.f32 %v1646, 0.0
      %v1711 = vmax.f32 %v1647, 0.0
      %1712 = vst [vmem:[#allocation7] sm:$0xff] %v1648
      %1713 = vst [vmem:[#allocation7 + $0x8] sm:$0xff] %v1649
      %1714 = vst [vmem:[#allocation7 + $0x10] sm:$0xff] %v1650
      %1715 = vst [vmem:[#allocation7 + $0x18] sm:$0xff] %v1651
      %1716 = vst [vmem:[#allocation7 + $0x20] sm:$0xff] %v1652
      %1717 = vst [vmem:[#allocation7 + $0x28] sm:$0xff] %v1653
      %1718 = vst [vmem:[#allocation7 + $0x30] sm:$0xff] %v1654
      %1719 = vst [vmem:[#allocation7 + $0x38] sm:$0xff] %v1655
      %1720 = vst [vmem:[#allocation7 + $0x40] sm:$0xff] %v1656
      %1721 = vst [vmem:[#allocation7 + $0x48] sm:$0xff] %v1657
      %1722 = vst [vmem:[#allocation7 + $0x50] sm:$0xff] %v1658
      %1723 = vst [vmem:[#allocation7 + $0x58] sm:$0xff] %v1659
      %1724 = vst [vmem:[#allocation7 + $0x60] sm:$0xff] %v1660
      %1725 = vst [vmem:[#allocation7 + $0x68] sm:$0xff] %v1661
      %1726 = vst [vmem:[#allocation7 + $0x70] sm:$0xff] %v1662
      %1727 = vst [vmem:[#allocation7 + $0x78] sm:$0xff] %v1663
      %1728 = vst [vmem:[#allocation7 + $0x80] sm:$0xff] %v1664
      %1729 = vst [vmem:[#allocation7 + $0x88] sm:$0xff] %v1665
      %1730 = vst [vmem:[#allocation7 + $0x90] sm:$0xff] %v1666
      %1731 = vst [vmem:[#allocation7 + $0x98] sm:$0xff] %v1667
      %1732 = vst [vmem:[#allocation7 + $0xa0] sm:$0xff] %v1668
      %1733 = vst [vmem:[#allocation7 + $0xa8] sm:$0xff] %v1669
      %1734 = vst [vmem:[#allocation7 + $0xb0] sm:$0xff] %v1670
      %1735 = vst [vmem:[#allocation7 + $0xb8] sm:$0xff] %v1671
      %1736 = vst [vmem:[#allocation7 + $0xc0] sm:$0xff] %v1672
      %1737 = vst [vmem:[#allocation7 + $0xc8] sm:$0xff] %v1673
      %1738 = vst [vmem:[#allocation7 + $0xd0] sm:$0xff] %v1674
      %1739 = vst [vmem:[#allocation7 + $0xd8] sm:$0xff] %v1675
      %1740 = vst [vmem:[#allocation7 + $0xe0] sm:$0xff] %v1676
      %1741 = vst [vmem:[#allocation7 + $0xe8] sm:$0xff] %v1677
      %1742 = vst [vmem:[#allocation7 + $0xf0] sm:$0xff] %v1678
      %1743 = vst [vmem:[#allocation7 + $0xf8] sm:$0xff] %v1679
      %1744 = vst [vmem:[#allocation7 + $0x100] sm:$0xff] %v1680
      %1745 = vst [vmem:[#allocation7 + $0x108] sm:$0xff] %v1681
      %1746 = vst [vmem:[#allocation7 + $0x110] sm:$0xff] %v1682
      %1747 = vst [vmem:[#allocation7 + $0x118] sm:$0xff] %v1683
      %1748 = vst [vmem:[#allocation7 + $0x120] sm:$0xff] %v1684
      %1749 = vst [vmem:[#allocation7 + $0x128] sm:$0xff] %v1685
      %1750 = vst [vmem:[#allocation7 + $0x130] sm:$0xff] %v1686
      %1751 = vst [vmem:[#allocation7 + $0x138] sm:$0xff] %v1687
      %1752 = vst [vmem:[#allocation7 + $0x140] sm:$0xff] %v1688
      %1753 = vst [vmem:[#allocation7 + $0x148] sm:$0xff] %v1689
      %1754 = vst [vmem:[#allocation7 + $0x150] sm:$0xff] %v1690
      %1755 = vst [vmem:[#allocation7 + $0x158] sm:$0xff] %v1691
      %1756 = vst [vmem:[#allocation7 + $0x160] sm:$0xff] %v1692
      %1757 = vst [vmem:[#allocation7 + $0x168] sm:$0xff] %v1693
      %1758 = vst [vmem:[#allocation7 + $0x170] sm:$0xff] %v1694
      %1759 = vst [vmem:[#allocation7 + $0x178] sm:$0xff] %v1695
      %1760 = vst [vmem:[#allocation7 + $0x180] sm:$0xff] %v1696
      %1761 = vst [vmem:[#allocation7 + $0x188] sm:$0xff] %v1697
      %1762 = vst [vmem:[#allocation7 + $0x190] sm:$0xff] %v1698
      %1763 = vst [vmem:[#allocation7 + $0x198] sm:$0xff] %v1699
      %1764 = vst [vmem:[#allocation7 + $0x1a0] sm:$0xff] %v1700
      %1765 = vst [vmem:[#allocation7 + $0x1a8] sm:$0xff] %v1701
      %1766 = vst [vmem:[#allocation7 + $0x1b0] sm:$0xff] %v1702
      %1767 = vst [vmem:[#allocation7 + $0x1b8] sm:$0xff] %v1703
      %1768 = vst [vmem:[#allocation7 + $0x1c0] sm:$0xff] %v1704
      %1769 = vst [vmem:[#allocation7 + $0x1c8] sm:$0xff] %v1705
      %1770 = vst [vmem:[#allocation7 + $0x1d0] sm:$0xff] %v1706
      %1771 = vst [vmem:[#allocation7 + $0x1d8] sm:$0xff] %v1707
      %1772 = vst [vmem:[#allocation7 + $0x1e0] sm:$0xff] %v1708
      %1773 = vst [vmem:[#allocation7 + $0x1e8] sm:$0xff] %v1709
      %1774 = vst [vmem:[#allocation7 + $0x1f0] sm:$0xff] %v1710
      %1775 = vst [vmem:[#allocation7 + $0x1f8] sm:$0xff] %v1711
    $region29: #{tpu_custom_call.1} parent=1 // pred_fallthru
      _
    // Predicated region
    $region30: #{tpu_custom_call.1} parent=1 // pred_check
      _
    $region31: #{tpu_custom_call.1} parent=1 // pred_check_branch
      %1777 = sbr.rel (0) target = $region33
    $region32: #{tpu_custom_call.1} parent=1 // pred_region
      %s1779 = ssub.s32 8192, 8192
      %1780 = vsyncadd [#allocation4], %s1779
      %s1781 = sshll.u32 [#allocation7], 4
      %s1782 = int_to_ptr.vmem [resolvable:$true] %s1781
      %1787 = dma.vmem_to_hbm [thread:$0]  %s1782, 8192, %s3, [#allocation4], 128, 128, 8
    $region33: #{tpu_custom_call.1} parent=1 // pred_fallthru
      _
    // Predicated region
    $region34: #{tpu_custom_call.1} parent=1 // pred_check
      _
    $region35: #{tpu_custom_call.1} parent=1 // pred_check_branch
      %1789 = sbr.rel (0) target = $region37
    $region36: #{tpu_custom_call.1} parent=1 // pred_region
      %1790 = dma.done [#allocation4], 8192
    $region37: #{tpu_custom_call.1} parent=1 // pred_fallthru
      _
    %1791 = vsyncpa [#allocation3], 1
    %1792 = vsyncpa [#allocation6], 1
    %1793 = vsyncpa [#allocation4], 1

</llo_original>
